<compile_context>
chip_gen: v7x
topology: tpu7x:2x2x1
jax: 0.10.0
libtpu: 0.0.40
codegen_flags: <defaults>
</compile_context>

<pallas_src>
import functools

import jax
import jax.numpy as jnp
from jax import lax
from jax.experimental import pallas as pl
from jax.experimental.pallas import tpu as pltpu


# ----------------------------- fused Pallas kernel -----------------------------

def _fused_kernel(x_ref, w1_ref, b1_ref, w2_ref, b2_ref, w3_ref, b3_ref,
                  wx_ref, bx_ref, whh_ref, whd_ref, bhd_ref,
                  out_ref, zx_sc, hist_sc, *, B, L, H):
    f32 = jnp.float32
    bf16 = jnp.bfloat16

    def sigmoid(z):                                  # exact sigmoid, EUP exp + f32 divide
        return 1.0 / (1.0 + jnp.exp(-z))

    # ---- DNN: 3x (Linear + ReLU); rows are time-major (t, b); bf16 MXU / f32 acc ----
    h = jnp.maximum(jnp.dot(x_ref[...], w1_ref[...], preferred_element_type=f32)
                    + b1_ref[...], 0.0)
    h = jnp.maximum(jnp.dot(h.astype(bf16), w2_ref[...], preferred_element_type=f32)
                    + b2_ref[...], 0.0)
    h = jnp.maximum(jnp.dot(h.astype(bf16), w3_ref[...], preferred_element_type=f32)
                    + b3_ref[...], 0.0)                               # (L*B, h2) f32

    # ---- hoisted input projection for ALL four LSTM directions: one matmul ----
    # Column layout (16H): gate-major [i | f | o | g]; each 4H gate block holds the four
    # directions in order [p_f, v_f, p_b, v_b].
    zx = jnp.dot(h.astype(bf16), wx_ref[...], preferred_element_type=f32) + bx_ref[...]

    # One-shot pre-pass (off the serial path): make row-block s of zx_sc hold the forward
    # directions at time s and the backward directions at time L-1-s.
    col = lax.broadcasted_iota(jnp.int32, (B, 16 * H), 1)
    is_bwd = jnp.logical_and(col >= 2 * H, col < 4 * H)
    for g in range(1, 4):
        lo = g * 4 * H + 2 * H
        hi = (g + 1) * 4 * H
        is_bwd = jnp.logical_or(is_bwd, jnp.logical_and(col >= lo, col < hi))
    for s in range(L):
        blk_f = zx[s * B:(s + 1) * B, :]
        blk_b = zx[(L - 1 - s) * B:(L - s) * B, :]
        zx_sc[pl.ds(s * B, B), :] = jnp.where(is_bwd, blk_b, blk_f)

    whh = whh_ref[...]                                # (4H, 16H) bf16, block-diagonal

    # ---- fused recurrence: one block-diagonal cell per step for all four directions ----
    h_st = jnp.zeros((B, 4 * H), f32)                 # [p_f | v_f | p_b | v_b]
    c_st = jnp.zeros((B, 4 * H), f32)
    for s in range(L):                                # L is small & static -> fully unrolled
        z = zx_sc[pl.ds(s * B, B), :] + jnp.dot(h_st.astype(bf16), whh,
                                                preferred_element_type=f32)   # (B, 16H)
        sg = sigmoid(z[:, 0:12 * H])                  # i|f|o for all 4 dirs, one slab
        i_ = sg[:, 0:4 * H]
        f_ = sg[:, 4 * H:8 * H]
        o_ = sg[:, 8 * H:12 * H]
        g_ = jnp.tanh(z[:, 12 * H:16 * H])
        c_st = f_ * c_st + i_ * g_
        h_st = o_ * jnp.tanh(c_st)
        hist_sc[pl.ds(s * B, B), pl.ds(0, 2 * H)] = h_st[:, 0:2 * H]                 # fwd @ t=s
        hist_sc[pl.ds((L - 1 - s) * B, B), pl.ds(2 * H, 2 * H)] = h_st[:, 2 * H:4 * H]  # bwd @ t=L-1-s

    # ---- fused heads: one row-permuted block-diagonal matmul + ReLU, 2-D output ----
    logits = (jnp.dot(hist_sc[...].astype(bf16), whd_ref[...], preferred_element_type=f32)
              + bhd_ref[...])
    out_ref[...] = jnp.maximum(logits, 0.0)


# ----------------------------- wrapper -----------------------------

def multidnn_rnn_forward(x, kp, n_pitch, n_voice):
    B, L, F = x.shape
    h2 = kp["w3"].shape[1]
    H = h2 // 2

    # Tiny (~couple KiB) layout fix so everything in-kernel is time-major & 2-D.
    x_tm = x.transpose(1, 0, 2).reshape(L * B, F).astype(jnp.bfloat16)

    vspec = pl.BlockSpec(memory_space=pltpu.MemorySpace.VMEM)
    kernel = functools.partial(_fused_kernel, B=B, L=L, H=H)

    out = pl.pallas_call(
        kernel,
        out_shape=jax.ShapeDtypeStruct((L * B, n_pitch + n_voice), jnp.float32),
        in_specs=[vspec] * 12,
        out_specs=vspec,
        scratch_shapes=[
            pltpu.VMEM((L * B, 16 * H), jnp.float32),   # time-aligned z_x for all 4 dirs
            pltpu.VMEM((L * B, 4 * H), jnp.float32),    # hidden-state history [pf|vf|pb|vb]
        ],
    )(x_tm, kp["w1"], kp["b1"], kp["w2"], kp["b2"], kp["w3"], kp["b3"],
      kp["wx"], kp["bx"], kp["whh"], kp["wh"], kp["bh"])

    out = out.reshape(L, B, n_pitch + n_voice).transpose(1, 0, 2)     # (B, L, NP+NV)
    return out[..., :n_pitch], out[..., n_pitch:]


# ----------------------------- parameters -----------------------------

def _xavier(key, fan_out, fan_in):
    std = (2.0 / (fan_in + fan_out)) ** 0.5
    return std * jax.random.normal(key, (fan_out, fan_in), jnp.float32)


def _lstm_dir_params(key, D, H):
    k1, k2, k3, k4 = jax.random.split(key, 4)
    s = 1.0 / (H ** 0.5)
    return {
        "W_ih": jax.random.uniform(k1, (4 * H, D), jnp.float32, -s, s),   # rows: i,f,g,o
        "W_hh": jax.random.uniform(k2, (4 * H, H), jnp.float32, -s, s),
        "b_ih": jax.random.uniform(k3, (4 * H,), jnp.float32, -s, s),
        "b_hh": jax.random.uniform(k4, (4 * H,), jnp.float32, -s, s),
    }


def init_base_params(key, d_feature, d_hidden, n_pitch, n_voice):
    """PyTorch-layout parameters (used by the pure-JAX reference)."""
    h0, h1, h2 = d_hidden
    H = h2 // 2
    ks = jax.random.split(key, 9)
    return {
        "dnn": {
            "w1": _xavier(ks[0], h0, d_feature).T, "b1": jnp.zeros((1, h0), jnp.float32),
            "w2": _xavier(ks[1], h1, h0).T,        "b2": jnp.zeros((1, h1), jnp.float32),
            "w3": _xavier(ks[2], h2, h1).T,        "b3": jnp.zeros((1, h2), jnp.float32),
        },
        "pitch_head": {"w": _xavier(ks[3], n_pitch, h2).T,
                       "b": jnp.zeros((1, n_pitch), jnp.float32)},
        "voice_head": {"w": _xavier(ks[4], n_voice, h2).T,
                       "b": jnp.zeros((1, n_voice), jnp.float32)},
        "pitch_lstm": {"fwd": _lstm_dir_params(ks[5], h2, H),
                       "bwd": _lstm_dir_params(ks[6], h2, H)},
        "voice_lstm": {"fwd": _lstm_dir_params(ks[7], h2, H),
                       "bwd": _lstm_dir_params(ks[8], h2, H)},
    }


def pack_kernel_params(base):
    """Pack PyTorch-layout params into the fused-kernel layout:
       - gate order permuted (i,f,g,o) -> (i,f,o,g), gate-major across the FOUR directions
         [p_f, v_f, p_b, v_b]; recurrent weights block-diagonal (4H, 16H); biases pre-summed
       - heads fused into a row-permuted block-diagonal (4H, NP+NV) matrix that consumes the
         [p_f | v_f | p_b | v_b] history layout directly
       - all matmul weights cast to bf16 (f32 accumulation in-kernel)."""
    bf16 = jnp.bfloat16
    h2 = base["dnn"]["w3"].shape[1]
    H = h2 // 2

    dirs = [base["pitch_lstm"]["fwd"], base["voice_lstm"]["fwd"],
            base["pitch_lstm"]["bwd"], base["voice_lstm"]["bwd"]]   # [p_f, v_f, p_b, v_b]
    gate_order = (0, 1, 3, 2)                     # PyTorch row blocks i,f,g,o -> i,f,o,g
    n_dir = len(dirs)

    wx_cols, whh_cols, b_cols = [], [], []
    for gk in gate_order:
        for di, d in enumerate(dirs):
            wx_cols.append(d["W_ih"][gk * H:(gk + 1) * H, :].T)               # (h2, H)
            colw = jnp.zeros((n_dir * H, H), jnp.float32)
            colw = colw.at[di * H:(di + 1) * H, :].set(d["W_hh"][gk * H:(gk + 1) * H, :].T)
            whh_cols.append(colw)                                             # block-diagonal
            b_cols.append(d["b_ih"][gk * H:(gk + 1) * H] + d["b_hh"][gk * H:(gk + 1) * H])
    wx_all = jnp.concatenate(wx_cols, axis=1)          # (h2, 16H)
    whh_all = jnp.concatenate(whh_cols, axis=1)        # (4H, 16H)
    bx_all = jnp.concatenate(b_cols).reshape(1, -1)    # (1, 16H)

    wp, bp = base["pitch_head"]["w"], base["pitch_head"]["b"]     # (2H, NP), (1, NP)
    wv, bv = base["voice_head"]["w"], base["voice_head"]["b"]     # (2H, NV), (1, NV)
    NP, NV = wp.shape[1], wv.shape[1]
    w_heads = jnp.zeros((4 * H, NP + NV), jnp.float32)
    w_heads = w_heads.at[0 * H:1 * H, 0:NP].set(wp[0:H])          # p_f rows
    w_heads = w_heads.at[2 * H:3 * H, 0:NP].set(wp[H:2 * H])      # p_b rows
    w_heads = w_heads.at[1 * H:2 * H, NP:].set(wv[0:H])           # v_f rows
    w_heads = w_heads.at[3 * H:4 * H, NP:].set(wv[H:2 * H])       # v_b rows
    b_heads = jnp.concatenate([bp, bv], axis=1)                   # (1, NP+NV)

    d = base["dnn"]
    return {
        "w1": d["w1"].astype(bf16), "b1": d["b1"],
        "w2": d["w2"].astype(bf16), "b2": d["b2"],
        "w3": d["w3"].astype(bf16), "b3": d["b3"],
        "wx": wx_all.astype(bf16), "bx": bx_all, "whh": whh_all.astype(bf16),
        "wh": w_heads.astype(bf16), "bh": b_heads,
    }


# ----------------------------- pure-JAX reference -----------------------------

def _lstm_ref_dir(x_tm, d):
    H = d["W_hh"].shape[1]
    Wi, Wh = d["W_ih"].T, d["W_hh"].T
    b = d["b_ih"] + d["b_hh"]
    B = x_tm.shape[1]

    def step(carry, x_t):
        h, c = carry
        z = x_t @ Wi + h @ Wh + b
        i = jax.nn.sigmoid(z[:, 0:H])
        f = jax.nn.sigmoid(z[:, H:2 * H])
        g = jnp.tanh(z[:, 2 * H:3 * H])
        o = jax.nn.sigmoid(z[:, 3 * H:4 * H])
        c = f * c + i * g
        h = o * jnp.tanh(c)
        return (h, c), h

    init = (jnp.zeros((B, H), jnp.float32), jnp.zeros((B, H), jnp.float32))
    _, hs = lax.scan(step, init, x_tm)
    return hs


def forward_ref(x, base):
    B, L, F = x.shape
    d = base["dnn"]
    h = jnp.maximum(x.reshape(B * L, F) @ d["w1"] + d["b1"], 0.0)
    h = jnp.maximum(h @ d["w2"] + d["b2"], 0.0)
    h = jnp.maximum(h @ d["w3"] + d["b3"], 0.0)
    h2 = d["w3"].shape[1]
    h_tm = h.reshape(B, L, h2).transpose(1, 0, 2)

    def bilstm(x_tm, q):
        fwd = _lstm_ref_dir(x_tm, q["fwd"])
        bwd = _lstm_ref_dir(x_tm[::-1], q["bwd"])[::-1]
        return jnp.concatenate([fwd, bwd], axis=-1)

    pr = bilstm(h_tm, base["pitch_lstm"]).transpose(1, 0, 2)   # (B, L, h2)
    vr = bilstm(h_tm, base["voice_lstm"]).transpose(1, 0, 2)
    pitch = jnp.maximum(pr @ base["pitch_head"]["w"] + base["pitch_head"]["b"], 0.0)
    voice = jnp.maximum(vr @ base["voice_head"]["w"] + base["voice_head"]["b"], 0.0)
    return pitch, voice


# ----------------------------- main -----------------------------

if __name__ == "__main__":
    B, L = 2, 8
    d_feature = 32
    d_hidden = (64, 64, 64)          # d_hidden[2] must be even (bidirectional LSTM)
    n_pitch, n_voice = 16, 2

    key = jax.random.PRNGKey(0)
    pkey, xkey = jax.random.split(key)
    base = init_base_params(pkey, d_feature, d_hidden, n_pitch, n_voice)
    kp = pack_kernel_params(base)
    x = jax.random.normal(xkey, (B, L, d_feature), jnp.float32)

    fwd = jax.jit(multidnn_rnn_forward, static_argnums=(2, 3))
    pitch, voice = fwd(x, kp, n_pitch, n_voice)
    jax.block_until_ready((pitch, voice))

    assert pitch.shape == (B, L, n_pitch) and voice.shape == (B, L, n_voice)

    p_ref, v_ref = forward_ref(x, base)
    # Tolerance sized for bf16 MXU operands (f32 accumulation / gate math / c,h state);
    # packing or layout bugs would produce O(1) errors and still trip these asserts.
    assert jnp.allclose(pitch, p_ref, atol=3e-2, rtol=3e-2), "pitch mismatch vs reference"
    assert jnp.allclose(voice, v_ref, atol=3e-2, rtol=3e-2), "voice mismatch vs reference"

    print("KERNEL_OK")
</pallas_src>

<mosaic_0001>
module attributes {stable_mosaic.version = 11 : i64} {
  func.func @_fused_kernel(%arg0: memref<16x32xbf16, #tpu.memory_space<vmem>>, %arg1: memref<32x64xbf16, #tpu.memory_space<vmem>>, %arg2: memref<1x64xf32, #tpu.memory_space<vmem>>, %arg3: memref<64x64xbf16, #tpu.memory_space<vmem>>, %arg4: memref<1x64xf32, #tpu.memory_space<vmem>>, %arg5: memref<64x64xbf16, #tpu.memory_space<vmem>>, %arg6: memref<1x64xf32, #tpu.memory_space<vmem>>, %arg7: memref<64x512xbf16, #tpu.memory_space<vmem>>, %arg8: memref<1x512xf32, #tpu.memory_space<vmem>>, %arg9: memref<128x512xbf16, #tpu.memory_space<vmem>>, %arg10: memref<128x18xbf16, #tpu.memory_space<vmem>>, %arg11: memref<1x18xf32, #tpu.memory_space<vmem>>, %arg12: memref<16x18xf32, #tpu.memory_space<vmem>>, %arg13: memref<16x512xf32, #tpu.memory_space<vmem>>, %arg14: memref<16x128xf32, #tpu.memory_space<vmem>>) attributes {dimension_semantics = [], scalar_prefetch = 0 : i64, scratch_operands = 2 : i64, tpu.core_type = #tpu.core_type<tc>} {
    %c0 = arith.constant 0 : index
    %c0_0 = arith.constant 0 : index
    %0 = vector.load %arg0[%c0, %c0_0] : memref<16x32xbf16, #tpu.memory_space<vmem>>, vector<16x32xbf16>
    %c0_1 = arith.constant 0 : index
    %c0_2 = arith.constant 0 : index
    %1 = vector.load %arg1[%c0_1, %c0_2] : memref<32x64xbf16, #tpu.memory_space<vmem>>, vector<32x64xbf16>
    %cst = arith.constant dense<0.000000e+00> : vector<16x64xf32>
    %2 = tpu.matmul %0, %1, %cst {dimension_numbers = #tpu.dot_dimension_numbers<[1], [0], [0], [1], [0, 0, 1, 1], [], []>} : vector<16x32xbf16>, vector<32x64xbf16>, vector<16x64xf32> -> vector<16x64xf32>
    %c0_3 = arith.constant 0 : index
    %c0_4 = arith.constant 0 : index
    %3 = vector.load %arg2[%c0_3, %c0_4] : memref<1x64xf32, #tpu.memory_space<vmem>>, vector<1x64xf32>
    %4 = vector.broadcast %3 : vector<1x64xf32> to vector<16x64xf32>
    %5 = arith.addf %2, %4 : vector<16x64xf32>
    %cst_5 = arith.constant 0.000000e+00 : f32
    %6 = vector.broadcast %cst_5 : f32 to vector<16x64xf32>
    %7 = arith.maximumf %5, %6 : vector<16x64xf32>
    %8 = arith.truncf %7 : vector<16x64xf32> to vector<16x64xbf16>
    %c0_6 = arith.constant 0 : index
    %c0_7 = arith.constant 0 : index
    %9 = vector.load %arg3[%c0_6, %c0_7] : memref<64x64xbf16, #tpu.memory_space<vmem>>, vector<64x64xbf16>
    %cst_8 = arith.constant dense<0.000000e+00> : vector<16x64xf32>
    %10 = tpu.matmul %8, %9, %cst_8 {dimension_numbers = #tpu.dot_dimension_numbers<[1], [0], [0], [1], [0, 0, 1, 1], [], []>} : vector<16x64xbf16>, vector<64x64xbf16>, vector<16x64xf32> -> vector<16x64xf32>
    %c0_9 = arith.constant 0 : index
    %c0_10 = arith.constant 0 : index
    %11 = vector.load %arg4[%c0_9, %c0_10] : memref<1x64xf32, #tpu.memory_space<vmem>>, vector<1x64xf32>
    %12 = vector.broadcast %11 : vector<1x64xf32> to vector<16x64xf32>
    %13 = arith.addf %10, %12 : vector<16x64xf32>
    %cst_11 = arith.constant 0.000000e+00 : f32
    %14 = vector.broadcast %cst_11 : f32 to vector<16x64xf32>
    %15 = arith.maximumf %13, %14 : vector<16x64xf32>
    %16 = arith.truncf %15 : vector<16x64xf32> to vector<16x64xbf16>
    %c0_12 = arith.constant 0 : index
    %c0_13 = arith.constant 0 : index
    %17 = vector.load %arg5[%c0_12, %c0_13] : memref<64x64xbf16, #tpu.memory_space<vmem>>, vector<64x64xbf16>
    %cst_14 = arith.constant dense<0.000000e+00> : vector<16x64xf32>
    %18 = tpu.matmul %16, %17, %cst_14 {dimension_numbers = #tpu.dot_dimension_numbers<[1], [0], [0], [1], [0, 0, 1, 1], [], []>} : vector<16x64xbf16>, vector<64x64xbf16>, vector<16x64xf32> -> vector<16x64xf32>
    %c0_15 = arith.constant 0 : index
    %c0_16 = arith.constant 0 : index
    %19 = vector.load %arg6[%c0_15, %c0_16] : memref<1x64xf32, #tpu.memory_space<vmem>>, vector<1x64xf32>
    %20 = vector.broadcast %19 : vector<1x64xf32> to vector<16x64xf32>
    %21 = arith.addf %18, %20 : vector<16x64xf32>
    %cst_17 = arith.constant 0.000000e+00 : f32
    %22 = vector.broadcast %cst_17 : f32 to vector<16x64xf32>
    %23 = arith.maximumf %21, %22 : vector<16x64xf32>
    %24 = arith.truncf %23 : vector<16x64xf32> to vector<16x64xbf16>
    %c0_18 = arith.constant 0 : index
    %c0_19 = arith.constant 0 : index
    %25 = vector.load %arg7[%c0_18, %c0_19] : memref<64x512xbf16, #tpu.memory_space<vmem>>, vector<64x512xbf16>
    %cst_20 = arith.constant dense<0.000000e+00> : vector<16x512xf32>
    %26 = tpu.matmul %24, %25, %cst_20 {dimension_numbers = #tpu.dot_dimension_numbers<[1], [0], [0], [1], [0, 0, 1, 1], [], []>} : vector<16x64xbf16>, vector<64x512xbf16>, vector<16x512xf32> -> vector<16x512xf32>
    %c0_21 = arith.constant 0 : index
    %c0_22 = arith.constant 0 : index
    %27 = vector.load %arg8[%c0_21, %c0_22] : memref<1x512xf32, #tpu.memory_space<vmem>>, vector<1x512xf32>
    %28 = vector.broadcast %27 : vector<1x512xf32> to vector<16x512xf32>
    %29 = arith.addf %26, %28 : vector<16x512xf32>
    %30 = tpu.iota {dimensions = array<i32: 1>} : vector<2x512xi32>
    %c64_i32 = arith.constant 64 : i32
    %31 = vector.broadcast %c64_i32 : i32 to vector<2x512xi32>
    %32 = arith.cmpi sge, %30, %31 : vector<2x512xi32>
    %c128_i32 = arith.constant 128 : i32
    %33 = vector.broadcast %c128_i32 : i32 to vector<2x512xi32>
    %34 = arith.cmpi slt, %30, %33 : vector<2x512xi32>
    %35 = arith.andi %32, %34 : vector<2x512xi1>
    %c192_i32 = arith.constant 192 : i32
    %36 = vector.broadcast %c192_i32 : i32 to vector<2x512xi32>
    %37 = arith.cmpi sge, %30, %36 : vector<2x512xi32>
    %c256_i32 = arith.constant 256 : i32
    %38 = vector.broadcast %c256_i32 : i32 to vector<2x512xi32>
    %39 = arith.cmpi slt, %30, %38 : vector<2x512xi32>
    %40 = arith.andi %37, %39 : vector<2x512xi1>
    %41 = arith.ori %35, %40 : vector<2x512xi1>
    %c320_i32 = arith.constant 320 : i32
    %42 = vector.broadcast %c320_i32 : i32 to vector<2x512xi32>
    %43 = arith.cmpi sge, %30, %42 : vector<2x512xi32>
    %c384_i32 = arith.constant 384 : i32
    %44 = vector.broadcast %c384_i32 : i32 to vector<2x512xi32>
    %45 = arith.cmpi slt, %30, %44 : vector<2x512xi32>
    %46 = arith.andi %43, %45 : vector<2x512xi1>
    %47 = arith.ori %41, %46 : vector<2x512xi1>
    %c448_i32 = arith.constant 448 : i32
    %48 = vector.broadcast %c448_i32 : i32 to vector<2x512xi32>
    %49 = arith.cmpi sge, %30, %48 : vector<2x512xi32>
    %c512_i32 = arith.constant 512 : i32
    %50 = vector.broadcast %c512_i32 : i32 to vector<2x512xi32>
    %51 = arith.cmpi slt, %30, %50 : vector<2x512xi32>
    %52 = arith.andi %49, %51 : vector<2x512xi1>
    %53 = arith.ori %47, %52 : vector<2x512xi1>
    %54 = vector.extract_strided_slice %29 {offsets = [0, 0], sizes = [2, 512], strides = [1, 1]} : vector<16x512xf32> to vector<2x512xf32>
    %55 = vector.extract_strided_slice %29 {offsets = [14, 0], sizes = [2, 512], strides = [1, 1]} : vector<16x512xf32> to vector<2x512xf32>
    %56 = arith.select %53, %55, %54 : vector<2x512xi1>, vector<2x512xf32>
    %c0_23 = arith.constant 0 : index
    %c0_24 = arith.constant 0 : index
    %57 = vector.load %arg13[%c0_23, %c0_24] : memref<16x512xf32, #tpu.memory_space<vmem>>, vector<2x512xf32>
    tpu.vector_store %arg13[%c0_23, %c0_24], %56 {strides = array<i32>} : memref<16x512xf32, #tpu.memory_space<vmem>>, vector<2x512xf32>,
    %58 = vector.extract_strided_slice %29 {offsets = [2, 0], sizes = [2, 512], strides = [1, 1]} : vector<16x512xf32> to vector<2x512xf32>
    %59 = vector.extract_strided_slice %29 {offsets = [12, 0], sizes = [2, 512], strides = [1, 1]} : vector<16x512xf32> to vector<2x512xf32>
    %60 = arith.select %53, %59, %58 : vector<2x512xi1>, vector<2x512xf32>
    %c2 = arith.constant 2 : index
    %c0_25 = arith.constant 0 : index
    %61 = vector.load %arg13[%c2, %c0_25] : memref<16x512xf32, #tpu.memory_space<vmem>>, vector<2x512xf32>
    tpu.vector_store %arg13[%c2, %c0_25], %60 {strides = array<i32>} : memref<16x512xf32, #tpu.memory_space<vmem>>, vector<2x512xf32>,
    %62 = vector.extract_strided_slice %29 {offsets = [4, 0], sizes = [2, 512], strides = [1, 1]} : vector<16x512xf32> to vector<2x512xf32>
    %63 = vector.extract_strided_slice %29 {offsets = [10, 0], sizes = [2, 512], strides = [1, 1]} : vector<16x512xf32> to vector<2x512xf32>
    %64 = arith.select %53, %63, %62 : vector<2x512xi1>, vector<2x512xf32>
    %c4 = arith.constant 4 : index
    %c0_26 = arith.constant 0 : index
    %65 = vector.load %arg13[%c4, %c0_26] : memref<16x512xf32, #tpu.memory_space<vmem>>, vector<2x512xf32>
    tpu.vector_store %arg13[%c4, %c0_26], %64 {strides = array<i32>} : memref<16x512xf32, #tpu.memory_space<vmem>>, vector<2x512xf32>,
    %66 = vector.extract_strided_slice %29 {offsets = [6, 0], sizes = [2, 512], strides = [1, 1]} : vector<16x512xf32> to vector<2x512xf32>
    %67 = vector.extract_strided_slice %29 {offsets = [8, 0], sizes = [2, 512], strides = [1, 1]} : vector<16x512xf32> to vector<2x512xf32>
    %68 = arith.select %53, %67, %66 : vector<2x512xi1>, vector<2x512xf32>
    %c6 = arith.constant 6 : index
    %c0_27 = arith.constant 0 : index
    %69 = vector.load %arg13[%c6, %c0_27] : memref<16x512xf32, #tpu.memory_space<vmem>>, vector<2x512xf32>
    tpu.vector_store %arg13[%c6, %c0_27], %68 {strides = array<i32>} : memref<16x512xf32, #tpu.memory_space<vmem>>, vector<2x512xf32>,
    %70 = vector.extract_strided_slice %29 {offsets = [8, 0], sizes = [2, 512], strides = [1, 1]} : vector<16x512xf32> to vector<2x512xf32>
    %71 = vector.extract_strided_slice %29 {offsets = [6, 0], sizes = [2, 512], strides = [1, 1]} : vector<16x512xf32> to vector<2x512xf32>
    %72 = arith.select %53, %71, %70 : vector<2x512xi1>, vector<2x512xf32>
    %c8 = arith.constant 8 : index
    %c0_28 = arith.constant 0 : index
    %73 = vector.load %arg13[%c8, %c0_28] : memref<16x512xf32, #tpu.memory_space<vmem>>, vector<2x512xf32>
    tpu.vector_store %arg13[%c8, %c0_28], %72 {strides = array<i32>} : memref<16x512xf32, #tpu.memory_space<vmem>>, vector<2x512xf32>,
    %74 = vector.extract_strided_slice %29 {offsets = [10, 0], sizes = [2, 512], strides = [1, 1]} : vector<16x512xf32> to vector<2x512xf32>
    %75 = vector.extract_strided_slice %29 {offsets = [4, 0], sizes = [2, 512], strides = [1, 1]} : vector<16x512xf32> to vector<2x512xf32>
    %76 = arith.select %53, %75, %74 : vector<2x512xi1>, vector<2x512xf32>
    %c10 = arith.constant 10 : index
    %c0_29 = arith.constant 0 : index
    %77 = vector.load %arg13[%c10, %c0_29] : memref<16x512xf32, #tpu.memory_space<vmem>>, vector<2x512xf32>
    tpu.vector_store %arg13[%c10, %c0_29], %76 {strides = array<i32>} : memref<16x512xf32, #tpu.memory_space<vmem>>, vector<2x512xf32>,
    %78 = vector.extract_strided_slice %29 {offsets = [12, 0], sizes = [2, 512], strides = [1, 1]} : vector<16x512xf32> to vector<2x512xf32>
    %79 = vector.extract_strided_slice %29 {offsets = [2, 0], sizes = [2, 512], strides = [1, 1]} : vector<16x512xf32> to vector<2x512xf32>
    %80 = arith.select %53, %79, %78 : vector<2x512xi1>, vector<2x512xf32>
    %c12 = arith.constant 12 : index
    %c0_30 = arith.constant 0 : index
    %81 = vector.load %arg13[%c12, %c0_30] : memref<16x512xf32, #tpu.memory_space<vmem>>, vector<2x512xf32>
    tpu.vector_store %arg13[%c12, %c0_30], %80 {strides = array<i32>} : memref<16x512xf32, #tpu.memory_space<vmem>>, vector<2x512xf32>,
    %82 = vector.extract_strided_slice %29 {offsets = [14, 0], sizes = [2, 512], strides = [1, 1]} : vector<16x512xf32> to vector<2x512xf32>
    %83 = vector.extract_strided_slice %29 {offsets = [0, 0], sizes = [2, 512], strides = [1, 1]} : vector<16x512xf32> to vector<2x512xf32>
    %84 = arith.select %53, %83, %82 : vector<2x512xi1>, vector<2x512xf32>
    %c14 = arith.constant 14 : index
    %c0_31 = arith.constant 0 : index
    %85 = vector.load %arg13[%c14, %c0_31] : memref<16x512xf32, #tpu.memory_space<vmem>>, vector<2x512xf32>
    tpu.vector_store %arg13[%c14, %c0_31], %84 {strides = array<i32>} : memref<16x512xf32, #tpu.memory_space<vmem>>, vector<2x512xf32>,
    %c0_32 = arith.constant 0 : index
    %c0_33 = arith.constant 0 : index
    %86 = vector.load %arg9[%c0_32, %c0_33] : memref<128x512xbf16, #tpu.memory_space<vmem>>, vector<128x512xbf16>
    %cst_34 = arith.constant 0.000000e+00 : f32
    %87 = vector.broadcast %cst_34 : f32 to vector<2x128xf32>
    %cst_35 = arith.constant 0.000000e+00 : f32
    %88 = vector.broadcast %cst_35 : f32 to vector<2x128xf32>
    %c0_36 = arith.constant 0 : index
    %c0_37 = arith.constant 0 : index
    %89 = vector.load %arg13[%c0_36, %c0_37] : memref<16x512xf32, #tpu.memory_space<vmem>>, vector<2x512xf32>
    %90 = arith.truncf %87 : vector<2x128xf32> to vector<2x128xbf16>
    %cst_38 = arith.constant dense<0.000000e+00> : vector<2x512xf32>
    %91 = tpu.matmul %90, %86, %cst_38 {dimension_numbers = #tpu.dot_dimension_numbers<[1], [0], [0], [1], [0, 0, 1, 1], [], []>} : vector<2x128xbf16>, vector<128x512xbf16>, vector<2x512xf32> -> vector<2x512xf32>
    %92 = arith.addf %89, %91 : vector<2x512xf32>
    %93 = vector.extract_strided_slice %92 {offsets = [0, 0], sizes = [2, 384], strides = [1, 1]} : vector<2x512xf32> to vector<2x384xf32>
    %cst_39 = arith.constant 0.000000e+00 : f32
    %94 = vector.broadcast %cst_39 : f32 to vector<2x384xf32>
    %95 = arith.subf %94, %93 : vector<2x384xf32>
    %96 = math.exp %95 : vector<2x384xf32>
    %cst_40 = arith.constant 1.000000e+00 : f32
    %97 = vector.broadcast %cst_40 : f32 to vector<2x384xf32>
    %98 = arith.addf %97, %96 : vector<2x384xf32>
    %cst_41 = arith.constant 1.000000e+00 : f32
    %99 = vector.broadcast %cst_41 : f32 to vector<2x384xf32>
    %100 = arith.divf %99, %98 : vector<2x384xf32>
    %101 = vector.extract_strided_slice %100 {offsets = [0, 0], sizes = [2, 128], strides = [1, 1]} : vector<2x384xf32> to vector<2x128xf32>
    %102 = vector.extract_strided_slice %100 {offsets = [0, 128], sizes = [2, 128], strides = [1, 1]} : vector<2x384xf32> to vector<2x128xf32>
    %103 = vector.extract_strided_slice %100 {offsets = [0, 256], sizes = [2, 128], strides = [1, 1]} : vector<2x384xf32> to vector<2x128xf32>
    %104 = vector.extract_strided_slice %92 {offsets = [0, 384], sizes = [2, 128], strides = [1, 1]} : vector<2x512xf32> to vector<2x128xf32>
    %105 = math.tanh %104 : vector<2x128xf32>
    %106 = arith.mulf %102, %88 : vector<2x128xf32>
    %107 = arith.mulf %101, %105 : vector<2x128xf32>
    %108 = arith.addf %106, %107 : vector<2x128xf32>
    %109 = math.tanh %108 : vector<2x128xf32>
    %110 = arith.mulf %103, %109 : vector<2x128xf32>
    %111 = vector.extract_strided_slice %110 {offsets = [0, 0], sizes = [2, 64], strides = [1, 1]} : vector<2x128xf32> to vector<2x64xf32>
    %c0_42 = arith.constant 0 : index
    %c0_43 = arith.constant 0 : index
    %112 = vector.load %arg14[%c0_42, %c0_43] : memref<16x128xf32, #tpu.memory_space<vmem>>, vector<2x64xf32>
    tpu.vector_store %arg14[%c0_42, %c0_43], %111 {strides = array<i32>} : memref<16x128xf32, #tpu.memory_space<vmem>>, vector<2x64xf32>,
    %113 = vector.extract_strided_slice %110 {offsets = [0, 64], sizes = [2, 64], strides = [1, 1]} : vector<2x128xf32> to vector<2x64xf32>
    %c14_44 = arith.constant 14 : index
    %c64 = arith.constant 64 : index
    %114 = vector.load %arg14[%c14_44, %c64] : memref<16x128xf32, #tpu.memory_space<vmem>>, vector<2x64xf32>
    tpu.vector_store %arg14[%c14_44, %c64], %113 {strides = array<i32>} : memref<16x128xf32, #tpu.memory_space<vmem>>, vector<2x64xf32>,
    %c2_45 = arith.constant 2 : index
    %c0_46 = arith.constant 0 : index
    %115 = vector.load %arg13[%c2_45, %c0_46] : memref<16x512xf32, #tpu.memory_space<vmem>>, vector<2x512xf32>
    %116 = arith.truncf %110 : vector<2x128xf32> to vector<2x128xbf16>
    %cst_47 = arith.constant dense<0.000000e+00> : vector<2x512xf32>
    %117 = tpu.matmul %116, %86, %cst_47 {dimension_numbers = #tpu.dot_dimension_numbers<[1], [0], [0], [1], [0, 0, 1, 1], [], []>} : vector<2x128xbf16>, vector<128x512xbf16>, vector<2x512xf32> -> vector<2x512xf32>
    %118 = arith.addf %115, %117 : vector<2x512xf32>
    %119 = vector.extract_strided_slice %118 {offsets = [0, 0], sizes = [2, 384], strides = [1, 1]} : vector<2x512xf32> to vector<2x384xf32>
    %cst_48 = arith.constant 0.000000e+00 : f32
    %120 = vector.broadcast %cst_48 : f32 to vector<2x384xf32>
    %121 = arith.subf %120, %119 : vector<2x384xf32>
    %122 = math.exp %121 : vector<2x384xf32>
    %cst_49 = arith.constant 1.000000e+00 : f32
    %123 = vector.broadcast %cst_49 : f32 to vector<2x384xf32>
    %124 = arith.addf %123, %122 : vector<2x384xf32>
    %cst_50 = arith.constant 1.000000e+00 : f32
    %125 = vector.broadcast %cst_50 : f32 to vector<2x384xf32>
    %126 = arith.divf %125, %124 : vector<2x384xf32>
    %127 = vector.extract_strided_slice %126 {offsets = [0, 0], sizes = [2, 128], strides = [1, 1]} : vector<2x384xf32> to vector<2x128xf32>
    %128 = vector.extract_strided_slice %126 {offsets = [0, 128], sizes = [2, 128], strides = [1, 1]} : vector<2x384xf32> to vector<2x128xf32>
    %129 = vector.extract_strided_slice %126 {offsets = [0, 256], sizes = [2, 128], strides = [1, 1]} : vector<2x384xf32> to vector<2x128xf32>
    %130 = vector.extract_strided_slice %118 {offsets = [0, 384], sizes = [2, 128], strides = [1, 1]} : vector<2x512xf32> to vector<2x128xf32>
    %131 = math.tanh %130 : vector<2x128xf32>
    %132 = arith.mulf %128, %108 : vector<2x128xf32>
    %133 = arith.mulf %127, %131 : vector<2x128xf32>
    %134 = arith.addf %132, %133 : vector<2x128xf32>
    %135 = math.tanh %134 : vector<2x128xf32>
    %136 = arith.mulf %129, %135 : vector<2x128xf32>
    %137 = vector.extract_strided_slice %136 {offsets = [0, 0], sizes = [2, 64], strides = [1, 1]} : vector<2x128xf32> to vector<2x64xf32>
    %c2_51 = arith.constant 2 : index
    %c0_52 = arith.constant 0 : index
    %138 = vector.load %arg14[%c2_51, %c0_52] : memref<16x128xf32, #tpu.memory_space<vmem>>, vector<2x64xf32>
    tpu.vector_store %arg14[%c2_51, %c0_52], %137 {strides = array<i32>} : memref<16x128xf32, #tpu.memory_space<vmem>>, vector<2x64xf32>,
    %139 = vector.extract_strided_slice %136 {offsets = [0, 64], sizes = [2, 64], strides = [1, 1]} : vector<2x128xf32> to vector<2x64xf32>
    %c12_53 = arith.constant 12 : index
    %c64_54 = arith.constant 64 : index
    %140 = vector.load %arg14[%c12_53, %c64_54] : memref<16x128xf32, #tpu.memory_space<vmem>>, vector<2x64xf32>
    tpu.vector_store %arg14[%c12_53, %c64_54], %139 {strides = array<i32>} : memref<16x128xf32, #tpu.memory_space<vmem>>, vector<2x64xf32>,
    %c4_55 = arith.constant 4 : index
    %c0_56 = arith.constant 0 : index
    %141 = vector.load %arg13[%c4_55, %c0_56] : memref<16x512xf32, #tpu.memory_space<vmem>>, vector<2x512xf32>
    %142 = arith.truncf %136 : vector<2x128xf32> to vector<2x128xbf16>
    %cst_57 = arith.constant dense<0.000000e+00> : vector<2x512xf32>
    %143 = tpu.matmul %142, %86, %cst_57 {dimension_numbers = #tpu.dot_dimension_numbers<[1], [0], [0], [1], [0, 0, 1, 1], [], []>} : vector<2x128xbf16>, vector<128x512xbf16>, vector<2x512xf32> -> vector<2x512xf32>
    %144 = arith.addf %141, %143 : vector<2x512xf32>
    %145 = vector.extract_strided_slice %144 {offsets = [0, 0], sizes = [2, 384], strides = [1, 1]} : vector<2x512xf32> to vector<2x384xf32>
    %cst_58 = arith.constant 0.000000e+00 : f32
    %146 = vector.broadcast %cst_58 : f32 to vector<2x384xf32>
    %147 = arith.subf %146, %145 : vector<2x384xf32>
    %148 = math.exp %147 : vector<2x384xf32>
    %cst_59 = arith.constant 1.000000e+00 : f32
    %149 = vector.broadcast %cst_59 : f32 to vector<2x384xf32>
    %150 = arith.addf %149, %148 : vector<2x384xf32>
    %cst_60 = arith.constant 1.000000e+00 : f32
    %151 = vector.broadcast %cst_60 : f32 to vector<2x384xf32>
    %152 = arith.divf %151, %150 : vector<2x384xf32>
    %153 = vector.extract_strided_slice %152 {offsets = [0, 0], sizes = [2, 128], strides = [1, 1]} : vector<2x384xf32> to vector<2x128xf32>
    %154 = vector.extract_strided_slice %152 {offsets = [0, 128], sizes = [2, 128], strides = [1, 1]} : vector<2x384xf32> to vector<2x128xf32>
    %155 = vector.extract_strided_slice %152 {offsets = [0, 256], sizes = [2, 128], strides = [1, 1]} : vector<2x384xf32> to vector<2x128xf32>
    %156 = vector.extract_strided_slice %144 {offsets = [0, 384], sizes = [2, 128], strides = [1, 1]} : vector<2x512xf32> to vector<2x128xf32>
    %157 = math.tanh %156 : vector<2x128xf32>
    %158 = arith.mulf %154, %134 : vector<2x128xf32>
    %159 = arith.mulf %153, %157 : vector<2x128xf32>
    %160 = arith.addf %158, %159 : vector<2x128xf32>
    %161 = math.tanh %160 : vector<2x128xf32>
    %162 = arith.mulf %155, %161 : vector<2x128xf32>
    %163 = vector.extract_strided_slice %162 {offsets = [0, 0], sizes = [2, 64], strides = [1, 1]} : vector<2x128xf32> to vector<2x64xf32>
    %c4_61 = arith.constant 4 : index
    %c0_62 = arith.constant 0 : index
    %164 = vector.load %arg14[%c4_61, %c0_62] : memref<16x128xf32, #tpu.memory_space<vmem>>, vector<2x64xf32>
    tpu.vector_store %arg14[%c4_61, %c0_62], %163 {strides = array<i32>} : memref<16x128xf32, #tpu.memory_space<vmem>>, vector<2x64xf32>,
    %165 = vector.extract_strided_slice %162 {offsets = [0, 64], sizes = [2, 64], strides = [1, 1]} : vector<2x128xf32> to vector<2x64xf32>
    %c10_63 = arith.constant 10 : index
    %c64_64 = arith.constant 64 : index
    %166 = vector.load %arg14[%c10_63, %c64_64] : memref<16x128xf32, #tpu.memory_space<vmem>>, vector<2x64xf32>
    tpu.vector_store %arg14[%c10_63, %c64_64], %165 {strides = array<i32>} : memref<16x128xf32, #tpu.memory_space<vmem>>, vector<2x64xf32>,
    %c6_65 = arith.constant 6 : index
    %c0_66 = arith.constant 0 : index
    %167 = vector.load %arg13[%c6_65, %c0_66] : memref<16x512xf32, #tpu.memory_space<vmem>>, vector<2x512xf32>
    %168 = arith.truncf %162 : vector<2x128xf32> to vector<2x128xbf16>
    %cst_67 = arith.constant dense<0.000000e+00> : vector<2x512xf32>
    %169 = tpu.matmul %168, %86, %cst_67 {dimension_numbers = #tpu.dot_dimension_numbers<[1], [0], [0], [1], [0, 0, 1, 1], [], []>} : vector<2x128xbf16>, vector<128x512xbf16>, vector<2x512xf32> -> vector<2x512xf32>
    %170 = arith.addf %167, %169 : vector<2x512xf32>
    %171 = vector.extract_strided_slice %170 {offsets = [0, 0], sizes = [2, 384], strides = [1, 1]} : vector<2x512xf32> to vector<2x384xf32>
    %cst_68 = arith.constant 0.000000e+00 : f32
    %172 = vector.broadcast %cst_68 : f32 to vector<2x384xf32>
    %173 = arith.subf %172, %171 : vector<2x384xf32>
    %174 = math.exp %173 : vector<2x384xf32>
    %cst_69 = arith.constant 1.000000e+00 : f32
    %175 = vector.broadcast %cst_69 : f32 to vector<2x384xf32>
    %176 = arith.addf %175, %174 : vector<2x384xf32>
    %cst_70 = arith.constant 1.000000e+00 : f32
    %177 = vector.broadcast %cst_70 : f32 to vector<2x384xf32>
    %178 = arith.divf %177, %176 : vector<2x384xf32>
    %179 = vector.extract_strided_slice %178 {offsets = [0, 0], sizes = [2, 128], strides = [1, 1]} : vector<2x384xf32> to vector<2x128xf32>
    %180 = vector.extract_strided_slice %178 {offsets = [0, 128], sizes = [2, 128], strides = [1, 1]} : vector<2x384xf32> to vector<2x128xf32>
    %181 = vector.extract_strided_slice %178 {offsets = [0, 256], sizes = [2, 128], strides = [1, 1]} : vector<2x384xf32> to vector<2x128xf32>
    %182 = vector.extract_strided_slice %170 {offsets = [0, 384], sizes = [2, 128], strides = [1, 1]} : vector<2x512xf32> to vector<2x128xf32>
    %183 = math.tanh %182 : vector<2x128xf32>
    %184 = arith.mulf %180, %160 : vector<2x128xf32>
    %185 = arith.mulf %179, %183 : vector<2x128xf32>
    %186 = arith.addf %184, %185 : vector<2x128xf32>
    %187 = math.tanh %186 : vector<2x128xf32>
    %188 = arith.mulf %181, %187 : vector<2x128xf32>
    %189 = vector.extract_strided_slice %188 {offsets = [0, 0], sizes = [2, 64], strides = [1, 1]} : vector<2x128xf32> to vector<2x64xf32>
    %c6_71 = arith.constant 6 : index
    %c0_72 = arith.constant 0 : index
    %190 = vector.load %arg14[%c6_71, %c0_72] : memref<16x128xf32, #tpu.memory_space<vmem>>, vector<2x64xf32>
    tpu.vector_store %arg14[%c6_71, %c0_72], %189 {strides = array<i32>} : memref<16x128xf32, #tpu.memory_space<vmem>>, vector<2x64xf32>,
    %191 = vector.extract_strided_slice %188 {offsets = [0, 64], sizes = [2, 64], strides = [1, 1]} : vector<2x128xf32> to vector<2x64xf32>
    %c8_73 = arith.constant 8 : index
    %c64_74 = arith.constant 64 : index
    %192 = vector.load %arg14[%c8_73, %c64_74] : memref<16x128xf32, #tpu.memory_space<vmem>>, vector<2x64xf32>
    tpu.vector_store %arg14[%c8_73, %c64_74], %191 {strides = array<i32>} : memref<16x128xf32, #tpu.memory_space<vmem>>, vector<2x64xf32>,
    %c8_75 = arith.constant 8 : index
    %c0_76 = arith.constant 0 : index
    %193 = vector.load %arg13[%c8_75, %c0_76] : memref<16x512xf32, #tpu.memory_space<vmem>>, vector<2x512xf32>
    %194 = arith.truncf %188 : vector<2x128xf32> to vector<2x128xbf16>
    %cst_77 = arith.constant dense<0.000000e+00> : vector<2x512xf32>
    %195 = tpu.matmul %194, %86, %cst_77 {dimension_numbers = #tpu.dot_dimension_numbers<[1], [0], [0], [1], [0, 0, 1, 1], [], []>} : vector<2x128xbf16>, vector<128x512xbf16>, vector<2x512xf32> -> vector<2x512xf32>
    %196 = arith.addf %193, %195 : vector<2x512xf32>
    %197 = vector.extract_strided_slice %196 {offsets = [0, 0], sizes = [2, 384], strides = [1, 1]} : vector<2x512xf32> to vector<2x384xf32>
    %cst_78 = arith.constant 0.000000e+00 : f32
    %198 = vector.broadcast %cst_78 : f32 to vector<2x384xf32>
    %199 = arith.subf %198, %197 : vector<2x384xf32>
    %200 = math.exp %199 : vector<2x384xf32>
    %cst_79 = arith.constant 1.000000e+00 : f32
    %201 = vector.broadcast %cst_79 : f32 to vector<2x384xf32>
    %202 = arith.addf %201, %200 : vector<2x384xf32>
    %cst_80 = arith.constant 1.000000e+00 : f32
    %203 = vector.broadcast %cst_80 : f32 to vector<2x384xf32>
    %204 = arith.divf %203, %202 : vector<2x384xf32>
    %205 = vector.extract_strided_slice %204 {offsets = [0, 0], sizes = [2, 128], strides = [1, 1]} : vector<2x384xf32> to vector<2x128xf32>
    %206 = vector.extract_strided_slice %204 {offsets = [0, 128], sizes = [2, 128], strides = [1, 1]} : vector<2x384xf32> to vector<2x128xf32>
    %207 = vector.extract_strided_slice %204 {offsets = [0, 256], sizes = [2, 128], strides = [1, 1]} : vector<2x384xf32> to vector<2x128xf32>
    %208 = vector.extract_strided_slice %196 {offsets = [0, 384], sizes = [2, 128], strides = [1, 1]} : vector<2x512xf32> to vector<2x128xf32>
    %209 = math.tanh %208 : vector<2x128xf32>
    %210 = arith.mulf %206, %186 : vector<2x128xf32>
    %211 = arith.mulf %205, %209 : vector<2x128xf32>
    %212 = arith.addf %210, %211 : vector<2x128xf32>
    %213 = math.tanh %212 : vector<2x128xf32>
    %214 = arith.mulf %207, %213 : vector<2x128xf32>
    %215 = vector.extract_strided_slice %214 {offsets = [0, 0], sizes = [2, 64], strides = [1, 1]} : vector<2x128xf32> to vector<2x64xf32>
    %c8_81 = arith.constant 8 : index
    %c0_82 = arith.constant 0 : index
    %216 = vector.load %arg14[%c8_81, %c0_82] : memref<16x128xf32, #tpu.memory_space<vmem>>, vector<2x64xf32>
    tpu.vector_store %arg14[%c8_81, %c0_82], %215 {strides = array<i32>} : memref<16x128xf32, #tpu.memory_space<vmem>>, vector<2x64xf32>,
    %217 = vector.extract_strided_slice %214 {offsets = [0, 64], sizes = [2, 64], strides = [1, 1]} : vector<2x128xf32> to vector<2x64xf32>
    %c6_83 = arith.constant 6 : index
    %c64_84 = arith.constant 64 : index
    %218 = vector.load %arg14[%c6_83, %c64_84] : memref<16x128xf32, #tpu.memory_space<vmem>>, vector<2x64xf32>
    tpu.vector_store %arg14[%c6_83, %c64_84], %217 {strides = array<i32>} : memref<16x128xf32, #tpu.memory_space<vmem>>, vector<2x64xf32>,
    %c10_85 = arith.constant 10 : index
    %c0_86 = arith.constant 0 : index
    %219 = vector.load %arg13[%c10_85, %c0_86] : memref<16x512xf32, #tpu.memory_space<vmem>>, vector<2x512xf32>
    %220 = arith.truncf %214 : vector<2x128xf32> to vector<2x128xbf16>
    %cst_87 = arith.constant dense<0.000000e+00> : vector<2x512xf32>
    %221 = tpu.matmul %220, %86, %cst_87 {dimension_numbers = #tpu.dot_dimension_numbers<[1], [0], [0], [1], [0, 0, 1, 1], [], []>} : vector<2x128xbf16>, vector<128x512xbf16>, vector<2x512xf32> -> vector<2x512xf32>
    %222 = arith.addf %219, %221 : vector<2x512xf32>
    %223 = vector.extract_strided_slice %222 {offsets = [0, 0], sizes = [2, 384], strides = [1, 1]} : vector<2x512xf32> to vector<2x384xf32>
    %cst_88 = arith.constant 0.000000e+00 : f32
    %224 = vector.broadcast %cst_88 : f32 to vector<2x384xf32>
    %225 = arith.subf %224, %223 : vector<2x384xf32>
    %226 = math.exp %225 : vector<2x384xf32>
    %cst_89 = arith.constant 1.000000e+00 : f32
    %227 = vector.broadcast %cst_89 : f32 to vector<2x384xf32>
    %228 = arith.addf %227, %226 : vector<2x384xf32>
    %cst_90 = arith.constant 1.000000e+00 : f32
    %229 = vector.broadcast %cst_90 : f32 to vector<2x384xf32>
    %230 = arith.divf %229, %228 : vector<2x384xf32>
    %231 = vector.extract_strided_slice %230 {offsets = [0, 0], sizes = [2, 128], strides = [1, 1]} : vector<2x384xf32> to vector<2x128xf32>
    %232 = vector.extract_strided_slice %230 {offsets = [0, 128], sizes = [2, 128], strides = [1, 1]} : vector<2x384xf32> to vector<2x128xf32>
    %233 = vector.extract_strided_slice %230 {offsets = [0, 256], sizes = [2, 128], strides = [1, 1]} : vector<2x384xf32> to vector<2x128xf32>
    %234 = vector.extract_strided_slice %222 {offsets = [0, 384], sizes = [2, 128], strides = [1, 1]} : vector<2x512xf32> to vector<2x128xf32>
    %235 = math.tanh %234 : vector<2x128xf32>
    %236 = arith.mulf %232, %212 : vector<2x128xf32>
    %237 = arith.mulf %231, %235 : vector<2x128xf32>
    %238 = arith.addf %236, %237 : vector<2x128xf32>
    %239 = math.tanh %238 : vector<2x128xf32>
    %240 = arith.mulf %233, %239 : vector<2x128xf32>
    %241 = vector.extract_strided_slice %240 {offsets = [0, 0], sizes = [2, 64], strides = [1, 1]} : vector<2x128xf32> to vector<2x64xf32>
    %c10_91 = arith.constant 10 : index
    %c0_92 = arith.constant 0 : index
    %242 = vector.load %arg14[%c10_91, %c0_92] : memref<16x128xf32, #tpu.memory_space<vmem>>, vector<2x64xf32>
    tpu.vector_store %arg14[%c10_91, %c0_92], %241 {strides = array<i32>} : memref<16x128xf32, #tpu.memory_space<vmem>>, vector<2x64xf32>,
    %243 = vector.extract_strided_slice %240 {offsets = [0, 64], sizes = [2, 64], strides = [1, 1]} : vector<2x128xf32> to vector<2x64xf32>
    %c4_93 = arith.constant 4 : index
    %c64_94 = arith.constant 64 : index
    %244 = vector.load %arg14[%c4_93, %c64_94] : memref<16x128xf32, #tpu.memory_space<vmem>>, vector<2x64xf32>
    tpu.vector_store %arg14[%c4_93, %c64_94], %243 {strides = array<i32>} : memref<16x128xf32, #tpu.memory_space<vmem>>, vector<2x64xf32>,
    %c12_95 = arith.constant 12 : index
    %c0_96 = arith.constant 0 : index
    %245 = vector.load %arg13[%c12_95, %c0_96] : memref<16x512xf32, #tpu.memory_space<vmem>>, vector<2x512xf32>
    %246 = arith.truncf %240 : vector<2x128xf32> to vector<2x128xbf16>
    %cst_97 = arith.constant dense<0.000000e+00> : vector<2x512xf32>
    %247 = tpu.matmul %246, %86, %cst_97 {dimension_numbers = #tpu.dot_dimension_numbers<[1], [0], [0], [1], [0, 0, 1, 1], [], []>} : vector<2x128xbf16>, vector<128x512xbf16>, vector<2x512xf32> -> vector<2x512xf32>
    %248 = arith.addf %245, %247 : vector<2x512xf32>
    %249 = vector.extract_strided_slice %248 {offsets = [0, 0], sizes = [2, 384], strides = [1, 1]} : vector<2x512xf32> to vector<2x384xf32>
    %cst_98 = arith.constant 0.000000e+00 : f32
    %250 = vector.broadcast %cst_98 : f32 to vector<2x384xf32>
    %251 = arith.subf %250, %249 : vector<2x384xf32>
    %252 = math.exp %251 : vector<2x384xf32>
    %cst_99 = arith.constant 1.000000e+00 : f32
    %253 = vector.broadcast %cst_99 : f32 to vector<2x384xf32>
    %254 = arith.addf %253, %252 : vector<2x384xf32>
    %cst_100 = arith.constant 1.000000e+00 : f32
    %255 = vector.broadcast %cst_100 : f32 to vector<2x384xf32>
    %256 = arith.divf %255, %254 : vector<2x384xf32>
    %257 = vector.extract_strided_slice %256 {offsets = [0, 0], sizes = [2, 128], strides = [1, 1]} : vector<2x384xf32> to vector<2x128xf32>
    %258 = vector.extract_strided_slice %256 {offsets = [0, 128], sizes = [2, 128], strides = [1, 1]} : vector<2x384xf32> to vector<2x128xf32>
    %259 = vector.extract_strided_slice %256 {offsets = [0, 256], sizes = [2, 128], strides = [1, 1]} : vector<2x384xf32> to vector<2x128xf32>
    %260 = vector.extract_strided_slice %248 {offsets = [0, 384], sizes = [2, 128], strides = [1, 1]} : vector<2x512xf32> to vector<2x128xf32>
    %261 = math.tanh %260 : vector<2x128xf32>
    %262 = arith.mulf %258, %238 : vector<2x128xf32>
    %263 = arith.mulf %257, %261 : vector<2x128xf32>
    %264 = arith.addf %262, %263 : vector<2x128xf32>
    %265 = math.tanh %264 : vector<2x128xf32>
    %266 = arith.mulf %259, %265 : vector<2x128xf32>
    %267 = vector.extract_strided_slice %266 {offsets = [0, 0], sizes = [2, 64], strides = [1, 1]} : vector<2x128xf32> to vector<2x64xf32>
    %c12_101 = arith.constant 12 : index
    %c0_102 = arith.constant 0 : index
    %268 = vector.load %arg14[%c12_101, %c0_102] : memref<16x128xf32, #tpu.memory_space<vmem>>, vector<2x64xf32>
    tpu.vector_store %arg14[%c12_101, %c0_102], %267 {strides = array<i32>} : memref<16x128xf32, #tpu.memory_space<vmem>>, vector<2x64xf32>,
    %269 = vector.extract_strided_slice %266 {offsets = [0, 64], sizes = [2, 64], strides = [1, 1]} : vector<2x128xf32> to vector<2x64xf32>
    %c2_103 = arith.constant 2 : index
    %c64_104 = arith.constant 64 : index
    %270 = vector.load %arg14[%c2_103, %c64_104] : memref<16x128xf32, #tpu.memory_space<vmem>>, vector<2x64xf32>
    tpu.vector_store %arg14[%c2_103, %c64_104], %269 {strides = array<i32>} : memref<16x128xf32, #tpu.memory_space<vmem>>, vector<2x64xf32>,
    %c14_105 = arith.constant 14 : index
    %c0_106 = arith.constant 0 : index
    %271 = vector.load %arg13[%c14_105, %c0_106] : memref<16x512xf32, #tpu.memory_space<vmem>>, vector<2x512xf32>
    %272 = arith.truncf %266 : vector<2x128xf32> to vector<2x128xbf16>
    %cst_107 = arith.constant dense<0.000000e+00> : vector<2x512xf32>
    %273 = tpu.matmul %272, %86, %cst_107 {dimension_numbers = #tpu.dot_dimension_numbers<[1], [0], [0], [1], [0, 0, 1, 1], [], []>} : vector<2x128xbf16>, vector<128x512xbf16>, vector<2x512xf32> -> vector<2x512xf32>
    %274 = arith.addf %271, %273 : vector<2x512xf32>
    %275 = vector.extract_strided_slice %274 {offsets = [0, 0], sizes = [2, 384], strides = [1, 1]} : vector<2x512xf32> to vector<2x384xf32>
    %cst_108 = arith.constant 0.000000e+00 : f32
    %276 = vector.broadcast %cst_108 : f32 to vector<2x384xf32>
    %277 = arith.subf %276, %275 : vector<2x384xf32>
    %278 = math.exp %277 : vector<2x384xf32>
    %cst_109 = arith.constant 1.000000e+00 : f32
    %279 = vector.broadcast %cst_109 : f32 to vector<2x384xf32>
    %280 = arith.addf %279, %278 : vector<2x384xf32>
    %cst_110 = arith.constant 1.000000e+00 : f32
    %281 = vector.broadcast %cst_110 : f32 to vector<2x384xf32>
    %282 = arith.divf %281, %280 : vector<2x384xf32>
    %283 = vector.extract_strided_slice %282 {offsets = [0, 0], sizes = [2, 128], strides = [1, 1]} : vector<2x384xf32> to vector<2x128xf32>
    %284 = vector.extract_strided_slice %282 {offsets = [0, 128], sizes = [2, 128], strides = [1, 1]} : vector<2x384xf32> to vector<2x128xf32>
    %285 = vector.extract_strided_slice %282 {offsets = [0, 256], sizes = [2, 128], strides = [1, 1]} : vector<2x384xf32> to vector<2x128xf32>
    %286 = vector.extract_strided_slice %274 {offsets = [0, 384], sizes = [2, 128], strides = [1, 1]} : vector<2x512xf32> to vector<2x128xf32>
    %287 = math.tanh %286 : vector<2x128xf32>
    %288 = arith.mulf %284, %264 : vector<2x128xf32>
    %289 = arith.mulf %283, %287 : vector<2x128xf32>
    %290 = arith.addf %288, %289 : vector<2x128xf32>
    %291 = math.tanh %290 : vector<2x128xf32>
    %292 = arith.mulf %285, %291 : vector<2x128xf32>
    %293 = vector.extract_strided_slice %292 {offsets = [0, 0], sizes = [2, 64], strides = [1, 1]} : vector<2x128xf32> to vector<2x64xf32>
    %c14_111 = arith.constant 14 : index
    %c0_112 = arith.constant 0 : index
    %294 = vector.load %arg14[%c14_111, %c0_112] : memref<16x128xf32, #tpu.memory_space<vmem>>, vector<2x64xf32>
    tpu.vector_store %arg14[%c14_111, %c0_112], %293 {strides = array<i32>} : memref<16x128xf32, #tpu.memory_space<vmem>>, vector<2x64xf32>,
    %295 = vector.extract_strided_slice %292 {offsets = [0, 64], sizes = [2, 64], strides = [1, 1]} : vector<2x128xf32> to vector<2x64xf32>
    %c0_113 = arith.constant 0 : index
    %c64_114 = arith.constant 64 : index
    %296 = vector.load %arg14[%c0_113, %c64_114] : memref<16x128xf32, #tpu.memory_space<vmem>>, vector<2x64xf32>
    tpu.vector_store %arg14[%c0_113, %c64_114], %295 {strides = array<i32>} : memref<16x128xf32, #tpu.memory_space<vmem>>, vector<2x64xf32>,
    %c0_115 = arith.constant 0 : index
    %c0_116 = arith.constant 0 : index
    %297 = vector.load %arg14[%c0_115, %c0_116] : memref<16x128xf32, #tpu.memory_space<vmem>>, vector<16x128xf32>
    %298 = arith.truncf %297 : vector<16x128xf32> to vector<16x128xbf16>
    %c0_117 = arith.constant 0 : index
    %c0_118 = arith.constant 0 : index
    %299 = vector.load %arg10[%c0_117, %c0_118] : memref<128x18xbf16, #tpu.memory_space<vmem>>, vector<128x18xbf16>
    %cst_119 = arith.constant dense<0.000000e+00> : vector<16x18xf32>
    %300 = tpu.matmul %298, %299, %cst_119 {dimension_numbers = #tpu.dot_dimension_numbers<[1], [0], [0], [1], [0, 0, 1, 1], [], []>} : vector<16x128xbf16>, vector<128x18xbf16>, vector<16x18xf32> -> vector<16x18xf32>
    %c0_120 = arith.constant 0 : index
    %c0_121 = arith.constant 0 : index
    %301 = vector.load %arg11[%c0_120, %c0_121] : memref<1x18xf32, #tpu.memory_space<vmem>>, vector<1x18xf32>
    %302 = vector.broadcast %301 : vector<1x18xf32> to vector<16x18xf32>
    %303 = arith.addf %300, %302 : vector<16x18xf32>
    %cst_122 = arith.constant 0.000000e+00 : f32
    %304 = vector.broadcast %cst_122 : f32 to vector<16x18xf32>
    %305 = arith.maximumf %303, %304 : vector<16x18xf32>
    %c0_123 = arith.constant 0 : index
    %c0_124 = arith.constant 0 : index
    %306 = vector.load %arg12[%c0_123, %c0_124] : memref<16x18xf32, #tpu.memory_space<vmem>>, vector<16x18xf32>
    tpu.vector_store %arg12[%c0_123, %c0_124], %305 {strides = array<i32>} : memref<16x18xf32, #tpu.memory_space<vmem>>, vector<16x18xf32>,
    return
  }
}

</mosaic_0001>

<llo_original>
// kernel: multidnn_rnn_forward.1
$region0: #{multidnn_rnn_forward.1}
  #allocation0 [shape = 'u32[]', space=smem, size = 0x4, offset = 0x4, fixed_abs, tag = 'smem constant byte address 0x4 - core index']
  #allocation1 [shape = 'u32[144,128]{1,0:T(1,128)}', space=vmem, size = 0x12000, scoped, tag = 'internal scratch']
  #allocation2 [shape = 'f32[16,512]{1,0:T(8,128)}', space=vmem, size = 0x8000, scoped, tag = 'scratch operand']
  #allocation3 [shape = 'f32[16,128]{1,0:T(8,128)}', space=vmem, size = 0x2000, scoped, tag = 'scratch operand']
  %s0 = inlined_call_operand.vmem [shape: bf16[16,32], index: 0, kind: input, shape index: {}]
  %s1 = inlined_call_operand.hbm [shape: bf16[32,64], index: 1, kind: input, shape index: {}]
  %s2 = inlined_call_operand.vmem [shape: f32[1,64], index: 2, kind: input, shape index: {}]
  %s3 = inlined_call_operand.vmem [shape: bf16[64,64], index: 3, kind: input, shape index: {}]
  %s4 = inlined_call_operand.hbm [shape: f32[1,64], index: 4, kind: input, shape index: {}]
  %s5 = inlined_call_operand.hbm [shape: bf16[64,64], index: 5, kind: input, shape index: {}]
  %s6 = inlined_call_operand.hbm [shape: f32[1,64], index: 6, kind: input, shape index: {}]
  %s7 = inlined_call_operand.vmem [shape: bf16[64,512], index: 7, kind: input, shape index: {}]
  %s8 = inlined_call_operand.hbm [shape: f32[1,512], index: 8, kind: input, shape index: {}]
  %s9 = inlined_call_operand.hbm [shape: bf16[128,512], index: 9, kind: input, shape index: {}]
  %s10 = inlined_call_operand.vmem [shape: bf16[128,18], index: 10, kind: input, shape index: {}]
  %s11 = inlined_call_operand.hbm [shape: f32[1,18], index: 11, kind: input, shape index: {}]
  %s12 = inlined_call_operand.vmem [shape: f32[16,18], index: 12, kind: output, shape index: {}]
  %s13 = sld [smem:[#allocation0]]
  $region86: #{multidnn_rnn_forward.1} parent=0
    _
  %s15 = ssub.s32 1, %s13
  %s16 = scalar_select 0, %s15, %s13
  $region1: #{multidnn_rnn_forward.1} parent=0
    #allocation4 [shape = 'u8[8192]{0}', space=vmem, size = 0x2000, scoped, tag = 'input window, operand 1, single buffered']
    #allocation5 [shape = 's32[1]{0}', space=sflag, size = 0x4, scoped, tag = 'scoped memory for multidnn_rnn_forward.1']
    #allocation6 [shape = 'u8[512]{0}', space=vmem, size = 0x400, scoped, tag = 'input window, operand 4, single buffered']
    #allocation7 [shape = 's32[1]{0}', space=sflag, size = 0x4, scoped, tag = 'scoped memory for multidnn_rnn_forward.1']
    #allocation8 [shape = 'u8[16384]{0}', space=vmem, size = 0x4000, scoped, tag = 'input window, operand 5, single buffered']
    #allocation9 [shape = 'u8[512]{0}', space=vmem, size = 0x400, scoped, tag = 'input window, operand 6, single buffered']
    #allocation10 [shape = 's32[1]{0}', space=sflag, size = 0x4, scoped, tag = 'scoped memory for multidnn_rnn_forward.1']
    #allocation11 [shape = 'u8[2048]{0}', space=vmem, size = 0x800, scoped, tag = 'input window, operand 8, single buffered']
    #allocation12 [shape = 'u8[131072]{0}', space=vmem, size = 0x20000, scoped, tag = 'input window, operand 9, single buffered']
    #allocation13 [shape = 's32[1]{0}', space=sflag, size = 0x4, scoped, tag = 'scoped memory for multidnn_rnn_forward.1']
    #allocation14 [shape = 'u8[512]{0}', space=vmem, size = 0x400, scoped, tag = 'input window, operand 11, single buffered']
    %17 = vsyncpa [#allocation5], 0
    %18 = vsyncpa [#allocation7], 0
    %19 = vsyncpa [#allocation10], 0
    %20 = vsyncpa [#allocation13], 0
    // Predicated region
    $region2: #{multidnn_rnn_forward.1} parent=1 // pred_check
      _
    $region3: #{multidnn_rnn_forward.1} parent=1 // pred_check_branch
      %22 = sbr.rel (0) target = $region5
    $region4: #{multidnn_rnn_forward.1} parent=1 // pred_region
      _
    $region5: #{multidnn_rnn_forward.1} parent=1 // pred_fallthru
      _
    // Predicated region
    $region6: #{multidnn_rnn_forward.1} parent=1 // pred_check
      _
    $region7: #{multidnn_rnn_forward.1} parent=1 // pred_check_branch
      %24 = sbr.rel (0) target = $region9
    $region8: #{multidnn_rnn_forward.1} parent=1 // pred_region
      %s26 = ssub.s32 256, 256
      %27 = vsyncadd [#allocation5], %s26
      %s28 = sshll.u32 [#allocation4], 4
      %s29 = int_to_ptr.vmem [resolvable:$true] %s28
      %34 = dma.hbm_to_vmem [thread:$0]  %s1, 256, %s29, [#allocation5], 64, 64, 4
    $region9: #{multidnn_rnn_forward.1} parent=1 // pred_fallthru
      _
    // Predicated region
    $region10: #{multidnn_rnn_forward.1} parent=1 // pred_check
      _
    $region11: #{multidnn_rnn_forward.1} parent=1 // pred_check_branch
      %36 = sbr.rel (0) target = $region13
    $region12: #{multidnn_rnn_forward.1} parent=1 // pred_region
      _
    $region13: #{multidnn_rnn_forward.1} parent=1 // pred_fallthru
      _
    // Predicated region
    $region14: #{multidnn_rnn_forward.1} parent=1 // pred_check
      _
    $region15: #{multidnn_rnn_forward.1} parent=1 // pred_check_branch
      %38 = sbr.rel (0) target = $region17
    $region16: #{multidnn_rnn_forward.1} parent=1 // pred_region
      _
    $region17: #{multidnn_rnn_forward.1} parent=1 // pred_fallthru
      _
    // Predicated region
    $region18: #{multidnn_rnn_forward.1} parent=1 // pred_check
      _
    $region19: #{multidnn_rnn_forward.1} parent=1 // pred_check_branch
      %40 = sbr.rel (0) target = $region21
    $region20: #{multidnn_rnn_forward.1} parent=1 // pred_region
      %s42 = ssub.s32 16, 16
      %43 = vsyncadd [#allocation7], %s42
      %s45 = sshll.u32 [#allocation6], 4
      %s46 = int_to_ptr.vmem [resolvable:$true] %s45
      %48 = dma.hbm_to_vmem [thread:$0]  %s4, 16, %s46, [#allocation7]
    $region21: #{multidnn_rnn_forward.1} parent=1 // pred_fallthru
      _
    // Predicated region
    $region22: #{multidnn_rnn_forward.1} parent=1 // pred_check
      _
    $region23: #{multidnn_rnn_forward.1} parent=1 // pred_check_branch
      %50 = sbr.rel (0) target = $region25
    $region24: #{multidnn_rnn_forward.1} parent=1 // pred_region
      %s52 = ssub.s32 512, 512
      %53 = vsyncadd [#allocation7], %s52
      %s54 = sshll.u32 [#allocation8], 4
      %s55 = int_to_ptr.vmem [resolvable:$true] %s54
      %60 = dma.hbm_to_vmem [thread:$0]  %s5, 512, %s55, [#allocation7], 64, 64, 4
    $region25: #{multidnn_rnn_forward.1} parent=1 // pred_fallthru
      _
    // Predicated region
    $region26: #{multidnn_rnn_forward.1} parent=1 // pred_check
      _
    $region27: #{multidnn_rnn_forward.1} parent=1 // pred_check_branch
      %62 = sbr.rel (0) target = $region29
    $region28: #{multidnn_rnn_forward.1} parent=1 // pred_region
      %s64 = ssub.s32 16, 16
      %65 = vsyncadd [#allocation10], %s64
      %s67 = sshll.u32 [#allocation9], 4
      %s68 = int_to_ptr.vmem [resolvable:$true] %s67
      %70 = dma.hbm_to_vmem [thread:$0]  %s6, 16, %s68, [#allocation10]
    $region29: #{multidnn_rnn_forward.1} parent=1 // pred_fallthru
      _
    // Predicated region
    $region30: #{multidnn_rnn_forward.1} parent=1 // pred_check
      _
    $region31: #{multidnn_rnn_forward.1} parent=1 // pred_check_branch
      %72 = sbr.rel (0) target = $region33
    $region32: #{multidnn_rnn_forward.1} parent=1 // pred_region
      _
    $region33: #{multidnn_rnn_forward.1} parent=1 // pred_fallthru
      _
    // Predicated region
    $region34: #{multidnn_rnn_forward.1} parent=1 // pred_check
      _
    $region35: #{multidnn_rnn_forward.1} parent=1 // pred_check_branch
      %74 = sbr.rel (0) target = $region37
    $region36: #{multidnn_rnn_forward.1} parent=1 // pred_region
      %s76 = ssub.s32 64, 64
      %77 = vsyncadd [#allocation10], %s76
      %s79 = sshll.u32 [#allocation11], 4
      %s80 = int_to_ptr.vmem [resolvable:$true] %s79
      %82 = dma.hbm_to_vmem [thread:$0]  %s8, 64, %s80, [#allocation10]
    $region37: #{multidnn_rnn_forward.1} parent=1 // pred_fallthru
      _
    // Predicated region
    $region38: #{multidnn_rnn_forward.1} parent=1 // pred_check
      _
    $region39: #{multidnn_rnn_forward.1} parent=1 // pred_check_branch
      %84 = sbr.rel (0) target = $region41
    $region40: #{multidnn_rnn_forward.1} parent=1 // pred_region
      %s86 = ssub.s32 4096, 4096
      %87 = vsyncadd [#allocation13], %s86
      %s88 = sshll.u32 [#allocation12], 4
      %s89 = int_to_ptr.vmem [resolvable:$true] %s88
      %94 = dma.hbm_to_vmem [thread:$0]  %s9, 4096, %s89, [#allocation13], 256, 256, 16
    $region41: #{multidnn_rnn_forward.1} parent=1 // pred_fallthru
      _
    // Predicated region
    $region42: #{multidnn_rnn_forward.1} parent=1 // pred_check
      _
    $region43: #{multidnn_rnn_forward.1} parent=1 // pred_check_branch
      %96 = sbr.rel (0) target = $region45
    $region44: #{multidnn_rnn_forward.1} parent=1 // pred_region
      _
    $region45: #{multidnn_rnn_forward.1} parent=1 // pred_fallthru
      _
    // Predicated region
    $region46: #{multidnn_rnn_forward.1} parent=1 // pred_check
      _
    $region47: #{multidnn_rnn_forward.1} parent=1 // pred_check_branch
      %98 = sbr.rel (0) target = $region49
    $region48: #{multidnn_rnn_forward.1} parent=1 // pred_region
      %s100 = ssub.s32 16, 16
      %101 = vsyncadd [#allocation13], %s100
      %s103 = sshll.u32 [#allocation14], 4
      %s104 = int_to_ptr.vmem [resolvable:$true] %s103
      %106 = dma.hbm_to_vmem [thread:$0]  %s11, 16, %s104, [#allocation13]
    $region49: #{multidnn_rnn_forward.1} parent=1 // pred_fallthru
      _
    // Predicated region
    $region50: #{multidnn_rnn_forward.1} parent=1 // pred_check
      _
    $region51: #{multidnn_rnn_forward.1} parent=1 // pred_check_branch
      %108 = sbr.rel (0) target = $region53
    $region52: #{multidnn_rnn_forward.1} parent=1 // pred_region
      %109 = dma.done [#allocation5], 256
    $region53: #{multidnn_rnn_forward.1} parent=1 // pred_fallthru
      _
    // Predicated region
    $region54: #{multidnn_rnn_forward.1} parent=1 // pred_check
      _
    $region55: #{multidnn_rnn_forward.1} parent=1 // pred_check_branch
      %111 = sbr.rel (0) target = $region57
    $region56: #{multidnn_rnn_forward.1} parent=1 // pred_region
      %112 = dma.done [#allocation7], 16
    $region57: #{multidnn_rnn_forward.1} parent=1 // pred_fallthru
      _
    // Predicated region
    $region58: #{multidnn_rnn_forward.1} parent=1 // pred_check
      _
    $region59: #{multidnn_rnn_forward.1} parent=1 // pred_check_branch
      %114 = sbr.rel (0) target = $region61
    $region60: #{multidnn_rnn_forward.1} parent=1 // pred_region
      %115 = dma.done [#allocation7], 512
    $region61: #{multidnn_rnn_forward.1} parent=1 // pred_fallthru
      _
    // Predicated region
    $region62: #{multidnn_rnn_forward.1} parent=1 // pred_check
      _
    $region63: #{multidnn_rnn_forward.1} parent=1 // pred_check_branch
      %117 = sbr.rel (0) target = $region65
    $region64: #{multidnn_rnn_forward.1} parent=1 // pred_region
      %118 = dma.done [#allocation10], 16
    $region65: #{multidnn_rnn_forward.1} parent=1 // pred_fallthru
      _
    // Predicated region
    $region66: #{multidnn_rnn_forward.1} parent=1 // pred_check
      _
    $region67: #{multidnn_rnn_forward.1} parent=1 // pred_check_branch
      %120 = sbr.rel (0) target = $region69
    $region68: #{multidnn_rnn_forward.1} parent=1 // pred_region
      %121 = dma.done [#allocation10], 64
    $region69: #{multidnn_rnn_forward.1} parent=1 // pred_fallthru
      _
    // Predicated region
    $region70: #{multidnn_rnn_forward.1} parent=1 // pred_check
      _
    $region71: #{multidnn_rnn_forward.1} parent=1 // pred_check_branch
      %123 = sbr.rel (0) target = $region73
    $region72: #{multidnn_rnn_forward.1} parent=1 // pred_region
      %124 = dma.done [#allocation13], 4096
    $region73: #{multidnn_rnn_forward.1} parent=1 // pred_fallthru
      _
    // Predicated region
    $region74: #{multidnn_rnn_forward.1} parent=1 // pred_check
      _
    $region75: #{multidnn_rnn_forward.1} parent=1 // pred_check_branch
      %126 = sbr.rel (0) target = $region77
    $region76: #{multidnn_rnn_forward.1} parent=1 // pred_region
      %127 = dma.done [#allocation13], 16
    $region77: #{multidnn_rnn_forward.1} parent=1 // pred_fallthru
      _
    %v129 = vld [vmem:[%s0] sm:$0xf]
    %v130 = vld [vmem:[%s0 + $0x4] sm:$0xf]
    %v131 = vld [vmem:[#allocation4] sm:$0xf]
    %v132 = vld [vmem:[#allocation4 + $0x4] sm:$0xf]
    %v133 = vld [vmem:[#allocation4 + $0x8] sm:$0xf]
    %v134 = vld [vmem:[#allocation4 + $0xc] sm:$0xf]
    %v135 = vld [vmem:[%s2] sm:$0x1]
    %v137 = vlaneseq
    %v138 = vshrl.u32 %v137, 7
    %v139 = vsub.s32 0, %v138
    %v140 = vrot.slane %v135, %v139
    %v144 = vunpack.c.l.b16 %v129
    %v145 = vunpack.c.l.b16 %v130
    %v146 = vpack.c.b16 %v145, %v144
    %v151 = vunpack.c.l.b16 %v131
    %v152 = vunpack.c.l.b16 %v132
    %v153 = vunpack.c.l.b16 %v133
    %v154 = vunpack.c.l.b16 %v134
    %v155 = vpack.c.b16 %v152, %v151
    %v156 = vpack.c.b16 %v154, %v153
    %vm159 = vcmask 261120
    %v161 = vsel %vm159, %v146, 0
    %163 = vmatprep.subr.bf16.mxu0 0
    %164 = vmatpush1.bf16.msra.mxu0 %v155
    %165 = vmatprep.subr.bf16.mxu0 0
    %166 = vmatpush1.bf16.msra.mxu0 %v156
    %167 = vmatprep.subr.bf16.mxu0 0
    %168 = vmatpush1.bf16.msra.mxu0 0
    %169 = vmatprep.subr.bf16.mxu0 0
    %170 = vmatpush1.bf16.msra.mxu0 0
    %171 = vmatprep.subr.bf16.mxu0 0
    %172 = vmatpush1.bf16.msra.mxu0 0
    %173 = vmatprep.subr.bf16.mxu0 0
    %174 = vmatpush1.bf16.msra.mxu0 0
    %175 = vmatprep.subr.bf16.mxu0 0
    %176 = vmatpush1.bf16.msra.mxu0 0
    %177 = vmatprep.subr.bf16.mxu0 0
    %178 = vmatpush1.bf16.msra.mxu0 0
    %179 = vmatprep.subr.bf16.mxu0 0
    %180 = vmatpush1.bf16.msra.mxu0 0
    %181 = vmatprep.subr.bf16.mxu0 0
    %182 = vmatpush1.bf16.msra.mxu0 0
    %183 = vmatprep.subr.bf16.mxu0 0
    %184 = vmatpush1.bf16.msra.mxu0 0
    %185 = vmatprep.subr.bf16.mxu0 0
    %186 = vmatpush1.bf16.msra.mxu0 0
    %187 = vmatprep.subr.bf16.mxu0 0
    %188 = vmatpush1.bf16.msra.mxu0 0
    %189 = vmatprep.subr.bf16.mxu0 0
    %190 = vmatpush1.bf16.msra.mxu0 0
    %191 = vmatprep.subr.bf16.mxu0 0
    %192 = vmatpush1.bf16.msra.mxu0 0
    %193 = vmatprep.subr.bf16.mxu0 0
    %194 = vmatpush1.bf16.msra.mxu0 0
    %195 = vmatprep.mubr.bf16.mxu0 0
    %196 = vmatmul.mubr.bf16.gmra.mrb[0].mxu0 %v161
    %v197 = vpop.f32.mrb[0].mxu0
    %v198 = vadd.f32 %v140, %v197
    %v199 = vpop.f32.mrb[0].mxu0
    %v200 = vpop.f32.mrb[0].mxu0
    %v201 = vadd.f32 %v140, %v200
    %v202 = vpop.f32.mrb[0].mxu0
    %203 = vdwg.mxu0
    %v204 = vmax.f32 %v198, 0.0
    %v205 = vmax.f32 %v201, 0.0
    %v206 = vpack.c.bf16 %v205, %v204
    %v207 = vld [vmem:[%s3] sm:$0xf]
    %v208 = vld [vmem:[%s3 + $0x4] sm:$0xf]
    %v209 = vld [vmem:[%s3 + $0x8] sm:$0xf]
    %v210 = vld [vmem:[%s3 + $0xc] sm:$0xf]
    %v211 = vld [vmem:[%s3 + $0x10] sm:$0xf]
    %v212 = vld [vmem:[%s3 + $0x14] sm:$0xf]
    %v213 = vld [vmem:[%s3 + $0x18] sm:$0xf]
    %v214 = vld [vmem:[%s3 + $0x1c] sm:$0xf]
    %v215 = vld [vmem:[#allocation6] sm:$0x1]
    %v217 = vlaneseq
    %v218 = vshrl.u32 %v217, 7
    %v219 = vsub.s32 0, %v218
    %v220 = vrot.slane %v215, %v219
    %v230 = vunpack.c.l.b16 %v207
    %v231 = vunpack.c.l.b16 %v208
    %v232 = vunpack.c.l.b16 %v209
    %v233 = vunpack.c.l.b16 %v210
    %v234 = vunpack.c.l.b16 %v211
    %v235 = vunpack.c.l.b16 %v212
    %v236 = vunpack.c.l.b16 %v213
    %v237 = vunpack.c.l.b16 %v214
    %v238 = vpack.c.b16 %v231, %v230
    %v239 = vpack.c.b16 %v233, %v232
    %v240 = vpack.c.b16 %v235, %v234
    %v241 = vpack.c.b16 %v237, %v236
    %vm246 = vcmask 523264
    %v248 = vsel %vm246, %v206, 0
    %250 = vmatprep.subr.bf16.mxu0 0
    %251 = vmatpush1.bf16.msra.mxu0 %v238
    %252 = vmatprep.subr.bf16.mxu0 0
    %253 = vmatpush1.bf16.msra.mxu0 %v239
    %254 = vmatprep.subr.bf16.mxu0 0
    %255 = vmatpush1.bf16.msra.mxu0 %v240
    %256 = vmatprep.subr.bf16.mxu0 0
    %257 = vmatpush1.bf16.msra.mxu0 %v241
    %258 = vmatprep.subr.bf16.mxu0 0
    %259 = vmatpush1.bf16.msra.mxu0 0
    %260 = vmatprep.subr.bf16.mxu0 0
    %261 = vmatpush1.bf16.msra.mxu0 0
    %262 = vmatprep.subr.bf16.mxu0 0
    %263 = vmatpush1.bf16.msra.mxu0 0
    %264 = vmatprep.subr.bf16.mxu0 0
    %265 = vmatpush1.bf16.msra.mxu0 0
    %266 = vmatprep.subr.bf16.mxu0 0
    %267 = vmatpush1.bf16.msra.mxu0 0
    %268 = vmatprep.subr.bf16.mxu0 0
    %269 = vmatpush1.bf16.msra.mxu0 0
    %270 = vmatprep.subr.bf16.mxu0 0
    %271 = vmatpush1.bf16.msra.mxu0 0
    %272 = vmatprep.subr.bf16.mxu0 0
    %273 = vmatpush1.bf16.msra.mxu0 0
    %274 = vmatprep.subr.bf16.mxu0 0
    %275 = vmatpush1.bf16.msra.mxu0 0
    %276 = vmatprep.subr.bf16.mxu0 0
    %277 = vmatpush1.bf16.msra.mxu0 0
    %278 = vmatprep.subr.bf16.mxu0 0
    %279 = vmatpush1.bf16.msra.mxu0 0
    %280 = vmatprep.subr.bf16.mxu0 0
    %281 = vmatpush1.bf16.msra.mxu0 0
    %282 = vmatprep.mubr.bf16.mxu0 0
    %283 = vmatmul.mubr.bf16.gmra.mrb[0].mxu0 %v248
    %v284 = vpop.f32.mrb[0].mxu0
    %v285 = vadd.f32 %v220, %v284
    %v286 = vpop.f32.mrb[0].mxu0
    %v287 = vpop.f32.mrb[0].mxu0
    %v288 = vadd.f32 %v220, %v287
    %v289 = vpop.f32.mrb[0].mxu0
    %290 = vdwg.mxu0
    %v291 = vmax.f32 %v285, 0.0
    %v292 = vmax.f32 %v288, 0.0
    %v293 = vpack.c.bf16 %v292, %v291
    %v294 = vld [vmem:[#allocation8] sm:$0xf]
    %v295 = vld [vmem:[#allocation8 + $0x4] sm:$0xf]
    %v296 = vld [vmem:[#allocation8 + $0x8] sm:$0xf]
    %v297 = vld [vmem:[#allocation8 + $0xc] sm:$0xf]
    %v298 = vld [vmem:[#allocation8 + $0x10] sm:$0xf]
    %v299 = vld [vmem:[#allocation8 + $0x14] sm:$0xf]
    %v300 = vld [vmem:[#allocation8 + $0x18] sm:$0xf]
    %v301 = vld [vmem:[#allocation8 + $0x1c] sm:$0xf]
    %v302 = vld [vmem:[#allocation9] sm:$0x1]
    %v304 = vlaneseq
    %v305 = vshrl.u32 %v304, 7
    %v306 = vsub.s32 0, %v305
    %v307 = vrot.slane %v302, %v306
    %v317 = vunpack.c.l.b16 %v294
    %v318 = vunpack.c.l.b16 %v295
    %v319 = vunpack.c.l.b16 %v296
    %v320 = vunpack.c.l.b16 %v297
    %v321 = vunpack.c.l.b16 %v298
    %v322 = vunpack.c.l.b16 %v299
    %v323 = vunpack.c.l.b16 %v300
    %v324 = vunpack.c.l.b16 %v301
    %v325 = vpack.c.b16 %v318, %v317
    %v326 = vpack.c.b16 %v320, %v319
    %v327 = vpack.c.b16 %v322, %v321
    %v328 = vpack.c.b16 %v324, %v323
    %v334 = vsel %vm246, %v293, 0
    %336 = vmatprep.subr.bf16.mxu0 0
    %337 = vmatpush1.bf16.msra.mxu0 %v325
    %338 = vmatprep.subr.bf16.mxu0 0
    %339 = vmatpush1.bf16.msra.mxu0 %v326
    %340 = vmatprep.subr.bf16.mxu0 0
    %341 = vmatpush1.bf16.msra.mxu0 %v327
    %342 = vmatprep.subr.bf16.mxu0 0
    %343 = vmatpush1.bf16.msra.mxu0 %v328
    %344 = vmatprep.subr.bf16.mxu0 0
    %345 = vmatpush1.bf16.msra.mxu0 0
    %346 = vmatprep.subr.bf16.mxu0 0
    %347 = vmatpush1.bf16.msra.mxu0 0
    %348 = vmatprep.subr.bf16.mxu0 0
    %349 = vmatpush1.bf16.msra.mxu0 0
    %350 = vmatprep.subr.bf16.mxu0 0
    %351 = vmatpush1.bf16.msra.mxu0 0
    %352 = vmatprep.subr.bf16.mxu0 0
    %353 = vmatpush1.bf16.msra.mxu0 0
    %354 = vmatprep.subr.bf16.mxu0 0
    %355 = vmatpush1.bf16.msra.mxu0 0
    %356 = vmatprep.subr.bf16.mxu0 0
    %357 = vmatpush1.bf16.msra.mxu0 0
    %358 = vmatprep.subr.bf16.mxu0 0
    %359 = vmatpush1.bf16.msra.mxu0 0
    %360 = vmatprep.subr.bf16.mxu0 0
    %361 = vmatpush1.bf16.msra.mxu0 0
    %362 = vmatprep.subr.bf16.mxu0 0
    %363 = vmatpush1.bf16.msra.mxu0 0
    %364 = vmatprep.subr.bf16.mxu0 0
    %365 = vmatpush1.bf16.msra.mxu0 0
    %366 = vmatprep.subr.bf16.mxu0 0
    %367 = vmatpush1.bf16.msra.mxu0 0
    %368 = vmatprep.mubr.bf16.mxu0 0
    %369 = vmatmul.mubr.bf16.gmra.mrb[0].mxu0 %v334
    %v370 = vpop.f32.mrb[0].mxu0
    %v371 = vadd.f32 %v307, %v370
    %v372 = vpop.f32.mrb[0].mxu0
    %v373 = vpop.f32.mrb[0].mxu0
    %v374 = vadd.f32 %v307, %v373
    %v375 = vpop.f32.mrb[0].mxu0
    %376 = vdwg.mxu0
    %v377 = vmax.f32 %v371, 0.0
    %v378 = vmax.f32 %v374, 0.0
    %v379 = vpack.c.bf16 %v378, %v377
    %v380 = vld [vmem:[%s7] sm:$0xff]
    %v381 = vld [vmem:[%s7 + $0x8] sm:$0xff]
    %v382 = vld [vmem:[%s7 + $0x10] sm:$0xff]
    %v383 = vld [vmem:[%s7 + $0x18] sm:$0xff]
    %v384 = vld [vmem:[%s7 + $0x20] sm:$0xff]
    %v385 = vld [vmem:[%s7 + $0x28] sm:$0xff]
    %v386 = vld [vmem:[%s7 + $0x30] sm:$0xff]
    %v387 = vld [vmem:[%s7 + $0x38] sm:$0xff]
    %v388 = vld [vmem:[%s7 + $0x40] sm:$0xff]
    %v389 = vld [vmem:[%s7 + $0x48] sm:$0xff]
    %v390 = vld [vmem:[%s7 + $0x50] sm:$0xff]
    %v391 = vld [vmem:[%s7 + $0x58] sm:$0xff]
    %v392 = vld [vmem:[%s7 + $0x60] sm:$0xff]
    %v393 = vld [vmem:[%s7 + $0x68] sm:$0xff]
    %v394 = vld [vmem:[%s7 + $0x70] sm:$0xff]
    %v395 = vld [vmem:[%s7 + $0x78] sm:$0xff]
    %v396 = vld [vmem:[#allocation11] sm:$0xf]
    %v398 = vlaneseq
    %v399 = vshrl.u32 %v398, 7
    %v400 = vsub.s32 0, %v399
    %v401 = vrot.slane %v396, %v400
    %v402 = vlaneseq
    %v403 = vshrl.u32 %v402, 7
    %v404 = vsub.s32 1, %v403
    %v405 = vrot.slane %v396, %v404
    %v406 = vlaneseq
    %v407 = vshrl.u32 %v406, 7
    %v408 = vsub.s32 2, %v407
    %v409 = vrot.slane %v396, %v408
    %v410 = vlaneseq
    %v411 = vshrl.u32 %v410, 7
    %v412 = vsub.s32 3, %v411
    %v413 = vrot.slane %v396, %v412
    %v434 = vunpack.c.l.b16 %v380
    %v435 = vunpack.c.h.b16 %v380
    %v436 = vunpack.c.l.b16 %v381
    %v437 = vunpack.c.h.b16 %v381
    %v438 = vunpack.c.l.b16 %v382
    %v439 = vunpack.c.h.b16 %v382
    %v440 = vunpack.c.l.b16 %v383
    %v441 = vunpack.c.h.b16 %v383
    %v442 = vunpack.c.l.b16 %v384
    %v443 = vunpack.c.h.b16 %v384
    %v444 = vunpack.c.l.b16 %v385
    %v445 = vunpack.c.h.b16 %v385
    %v446 = vunpack.c.l.b16 %v386
    %v447 = vunpack.c.h.b16 %v386
    %v448 = vunpack.c.l.b16 %v387
    %v449 = vunpack.c.h.b16 %v387
    %v450 = vunpack.c.l.b16 %v388
    %v451 = vunpack.c.h.b16 %v388
    %v452 = vunpack.c.l.b16 %v389
    %v453 = vunpack.c.h.b16 %v389
    %v454 = vunpack.c.l.b16 %v390
    %v455 = vunpack.c.h.b16 %v390
    %v456 = vunpack.c.l.b16 %v391
    %v457 = vunpack.c.h.b16 %v391
    %v458 = vunpack.c.l.b16 %v392
    %v459 = vunpack.c.h.b16 %v392
    %v460 = vunpack.c.l.b16 %v393
    %v461 = vunpack.c.h.b16 %v393
    %v462 = vunpack.c.l.b16 %v394
    %v463 = vunpack.c.h.b16 %v394
    %v464 = vunpack.c.l.b16 %v395
    %v465 = vunpack.c.h.b16 %v395
    %v466 = vpack.c.b16 %v438, %v434
    %v467 = vpack.c.b16 %v439, %v435
    %v468 = vpack.c.b16 %v440, %v436
    %v469 = vpack.c.b16 %v441, %v437
    %v470 = vpack.c.b16 %v446, %v442
    %v471 = vpack.c.b16 %v447, %v443
    %v472 = vpack.c.b16 %v448, %v444
    %v473 = vpack.c.b16 %v449, %v445
    %v474 = vpack.c.b16 %v454, %v450
    %v475 = vpack.c.b16 %v455, %v451
    %v476 = vpack.c.b16 %v456, %v452
    %v477 = vpack.c.b16 %v457, %v453
    %v478 = vpack.c.b16 %v462, %v458
    %v479 = vpack.c.b16 %v463, %v459
    %v480 = vpack.c.b16 %v464, %v460
    %v481 = vpack.c.b16 %v465, %v461
    %v499 = vsel %vm246, %v379, 0
    %501 = vmatprep.subr.bf16.mxu0 %v467
    %502 = vmatpush1.bf16.msra.mxu0 %v466
    %503 = vmatprep.subr.bf16.mxu0 %v471
    %504 = vmatpush1.bf16.msra.mxu0 %v470
    %505 = vmatprep.subr.bf16.mxu0 %v475
    %506 = vmatpush1.bf16.msra.mxu0 %v474
    %507 = vmatprep.subr.bf16.mxu0 %v479
    %508 = vmatpush1.bf16.msra.mxu0 %v478
    %509 = vmatprep.subr.bf16.mxu0 0
    %510 = vmatpush1.bf16.msra.mxu0 0
    %511 = vmatprep.subr.bf16.mxu0 0
    %512 = vmatpush1.bf16.msra.mxu0 0
    %513 = vmatprep.subr.bf16.mxu0 0
    %514 = vmatpush1.bf16.msra.mxu0 0
    %515 = vmatprep.subr.bf16.mxu0 0
    %516 = vmatpush1.bf16.msra.mxu0 0
    %517 = vmatprep.subr.bf16.mxu0 0
    %518 = vmatpush1.bf16.msra.mxu0 0
    %519 = vmatprep.subr.bf16.mxu0 0
    %520 = vmatpush1.bf16.msra.mxu0 0
    %521 = vmatprep.subr.bf16.mxu0 0
    %522 = vmatpush1.bf16.msra.mxu0 0
    %523 = vmatprep.subr.bf16.mxu0 0
    %524 = vmatpush1.bf16.msra.mxu0 0
    %525 = vmatprep.subr.bf16.mxu0 0
    %526 = vmatpush1.bf16.msra.mxu0 0
    %527 = vmatprep.subr.bf16.mxu0 0
    %528 = vmatpush1.bf16.msra.mxu0 0
    %529 = vmatprep.subr.bf16.mxu0 0
    %530 = vmatpush1.bf16.msra.mxu0 0
    %531 = vmatprep.subr.bf16.mxu0 0
    %532 = vmatpush1.bf16.msra.mxu0 0
    %533 = vmatprep.mubr.bf16.mxu0 0
    %534 = vmatmul.mubr.bf16.gmra.mrb[0].mxu0 %v499
    %v535 = vpop.f32.mrb[0].mxu0
    %v536 = vadd.f32 %v401, %v535
    %v537 = vpop.f32.mrb[0].mxu0
    %v538 = vadd.f32 %v405, %v537
    %v539 = vpop.f32.mrb[0].mxu0
    %v540 = vadd.f32 %v401, %v539
    %v541 = vpop.f32.mrb[0].mxu0
    %v542 = vadd.f32 %v405, %v541
    %543 = vdwg.mxu0
    %544 = vmatprep.subr.bf16.mxu0 %v469
    %545 = vmatpush1.bf16.msra.mxu0 %v468
    %546 = vmatprep.subr.bf16.mxu0 %v473
    %547 = vmatpush1.bf16.msra.mxu0 %v472
    %548 = vmatprep.subr.bf16.mxu0 %v477
    %549 = vmatpush1.bf16.msra.mxu0 %v476
    %550 = vmatprep.subr.bf16.mxu0 %v481
    %551 = vmatpush1.bf16.msra.mxu0 %v480
    %552 = vmatprep.subr.bf16.mxu0 0
    %553 = vmatpush1.bf16.msra.mxu0 0
    %554 = vmatprep.subr.bf16.mxu0 0
    %555 = vmatpush1.bf16.msra.mxu0 0
    %556 = vmatprep.subr.bf16.mxu0 0
    %557 = vmatpush1.bf16.msra.mxu0 0
    %558 = vmatprep.subr.bf16.mxu0 0
    %559 = vmatpush1.bf16.msra.mxu0 0
    %560 = vmatprep.subr.bf16.mxu0 0
    %561 = vmatpush1.bf16.msra.mxu0 0
    %562 = vmatprep.subr.bf16.mxu0 0
    %563 = vmatpush1.bf16.msra.mxu0 0
    %564 = vmatprep.subr.bf16.mxu0 0
    %565 = vmatpush1.bf16.msra.mxu0 0
    %566 = vmatprep.subr.bf16.mxu0 0
    %567 = vmatpush1.bf16.msra.mxu0 0
    %568 = vmatprep.subr.bf16.mxu0 0
    %569 = vmatpush1.bf16.msra.mxu0 0
    %570 = vmatprep.subr.bf16.mxu0 0
    %571 = vmatpush1.bf16.msra.mxu0 0
    %572 = vmatprep.subr.bf16.mxu0 0
    %573 = vmatpush1.bf16.msra.mxu0 0
    %574 = vmatprep.subr.bf16.mxu0 0
    %575 = vmatpush1.bf16.msra.mxu0 0
    %576 = vmatprep.mubr.bf16.mxu0 0
    %577 = vmatmul.mubr.bf16.gmra.mrb[0].mxu0 %v499
    %v578 = vpop.f32.mrb[0].mxu0
    %v579 = vadd.f32 %v409, %v578
    %v580 = vpop.f32.mrb[0].mxu0
    %v581 = vadd.f32 %v413, %v580
    %v582 = vpop.f32.mrb[0].mxu0
    %v583 = vadd.f32 %v409, %v582
    %v584 = vpop.f32.mrb[0].mxu0
    %v585 = vadd.f32 %v413, %v584
    %586 = vdwg.mxu0
    %v587 = vlaneseq
    %v588 = vand.u32 %v587, 127
    %v589 = vadd.s32 %v588, 128
    %v590 = vadd.s32 %v588, 256
    %v591 = vadd.s32 %v588, 384
    %vm592 = vcmp.ge.s32.totalorder %v588, 64
    %vm593 = vcmp.ge.s32.totalorder %v589, 64
    %vm594 = vcmp.ge.s32.totalorder %v590, 64
    %vm595 = vcmp.ge.s32.totalorder %v591, 64
    %vm596 = vcmp.lt.s32.totalorder %v588, 128
    %vm597 = vcmp.lt.s32.totalorder %v589, 128
    %vm598 = vcmp.lt.s32.totalorder %v590, 128
    %vm599 = vcmp.lt.s32.totalorder %v591, 128
    %vm600 = vmand %vm592, %vm596
    %vm601 = vmand %vm593, %vm597
    %vm602 = vmand %vm594, %vm598
    %vm603 = vmand %vm595, %vm599
    %vm604 = vcmp.ge.s32.totalorder %v588, 192
    %vm605 = vcmp.ge.s32.totalorder %v589, 192
    %vm606 = vcmp.ge.s32.totalorder %v590, 192
    %vm607 = vcmp.ge.s32.totalorder %v591, 192
    %vm608 = vcmp.lt.s32.totalorder %v588, 256
    %vm609 = vcmp.lt.s32.totalorder %v589, 256
    %vm610 = vcmp.lt.s32.totalorder %v590, 256
    %vm611 = vcmp.lt.s32.totalorder %v591, 256
    %vm612 = vmand %vm604, %vm608
    %vm613 = vmand %vm605, %vm609
    %vm614 = vmand %vm606, %vm610
    %vm615 = vmand %vm607, %vm611
    %vm616 = vmor %vm600, %vm612
    %vm617 = vmor %vm601, %vm613
    %vm618 = vmor %vm602, %vm614
    %vm619 = vmor %vm603, %vm615
    %vm620 = vcmp.ge.s32.totalorder %v588, 320
    %vm621 = vcmp.ge.s32.totalorder %v589, 320
    %vm622 = vcmp.ge.s32.totalorder %v590, 320
    %vm623 = vcmp.ge.s32.totalorder %v591, 320
    %vm624 = vcmp.lt.s32.totalorder %v588, 384
    %vm625 = vcmp.lt.s32.totalorder %v589, 384
    %vm626 = vcmp.lt.s32.totalorder %v590, 384
    %vm627 = vcmp.lt.s32.totalorder %v591, 384
    %vm628 = vmand %vm620, %vm624
    %vm629 = vmand %vm621, %vm625
    %vm630 = vmand %vm622, %vm626
    %vm631 = vmand %vm623, %vm627
    %vm632 = vmor %vm616, %vm628
    %vm633 = vmor %vm617, %vm629
    %vm634 = vmor %vm618, %vm630
    %vm635 = vmor %vm619, %vm631
    %vm636 = vcmp.ge.s32.totalorder %v588, 448
    %vm637 = vcmp.ge.s32.totalorder %v589, 448
    %vm638 = vcmp.ge.s32.totalorder %v590, 448
    %vm639 = vcmp.ge.s32.totalorder %v591, 448
    %vm640 = vcmp.lt.s32.totalorder %v588, 512
    %vm641 = vcmp.lt.s32.totalorder %v589, 512
    %vm642 = vcmp.lt.s32.totalorder %v590, 512
    %vm643 = vcmp.lt.s32.totalorder %v591, 512
    %vm644 = vmand %vm636, %vm640
    %vm645 = vmand %vm637, %vm641
    %vm646 = vmand %vm638, %vm642
    %vm647 = vmand %vm639, %vm643
    %vm648 = vmor %vm632, %vm644
    %vm649 = vmor %vm633, %vm645
    %vm650 = vmor %vm634, %vm646
    %vm651 = vmor %vm635, %vm647
    %v656 = vrot.slane %v536, 2
    %v657 = vrot.slane %v538, 2
    %v658 = vrot.slane %v579, 2
    %v659 = vrot.slane %v581, 2
    %v664 = vsel %vm648, %v540, %v656
    %v665 = vsel %vm649, %v542, %v657
    %v666 = vsel %vm650, %v583, %v658
    %v667 = vsel %vm651, %v585, %v659
    %v672 = vrot.slane %v664, 6
    %v673 = vrot.slane %v665, 6
    %v674 = vrot.slane %v666, 6
    %v675 = vrot.slane %v667, 6
    %680 = vst [vmem:[#allocation2] sm:$0x3] %v672
    %681 = vst [vmem:[#allocation2 + $0x8] sm:$0x3] %v673
    %682 = vst [vmem:[#allocation2 + $0x10] sm:$0x3] %v674
    %683 = vst [vmem:[#allocation2 + $0x18] sm:$0x3] %v675
    %v684 = vrot.slane %v536, 6
    %v685 = vrot.slane %v538, 6
    %v686 = vrot.slane %v579, 6
    %v687 = vrot.slane %v581, 6
    %v692 = vsel %vm648, %v540, %v684
    %v693 = vsel %vm649, %v542, %v685
    %v694 = vsel %vm650, %v583, %v686
    %v695 = vsel %vm651, %v585, %v687
    %v700 = vrot.slane %v692, 2
    %v701 = vrot.slane %v693, 2
    %v702 = vrot.slane %v694, 2
    %v703 = vrot.slane %v695, 2
    %708 = vst [vmem:[#allocation2] sm:$0xc] %v700
    %709 = vst [vmem:[#allocation2 + $0x8] sm:$0xc] %v701
    %710 = vst [vmem:[#allocation2 + $0x10] sm:$0xc] %v702
    %711 = vst [vmem:[#allocation2 + $0x18] sm:$0xc] %v703
    %712 = vst [vmem:[#allocation2] sm:$0x30] %v672
    %713 = vst [vmem:[#allocation2 + $0x8] sm:$0x30] %v673
    %714 = vst [vmem:[#allocation2 + $0x10] sm:$0x30] %v674
    %715 = vst [vmem:[#allocation2 + $0x18] sm:$0x30] %v675
    %716 = vst [vmem:[#allocation2] sm:$0xc0] %v700
    %717 = vst [vmem:[#allocation2 + $0x8] sm:$0xc0] %v701
    %718 = vst [vmem:[#allocation2 + $0x10] sm:$0xc0] %v702
    %719 = vst [vmem:[#allocation2 + $0x18] sm:$0xc0] %v703
    %v724 = vrot.slane %v540, 2
    %v725 = vrot.slane %v542, 2
    %v726 = vrot.slane %v583, 2
    %v727 = vrot.slane %v585, 2
    %v732 = vsel %vm648, %v536, %v724
    %v733 = vsel %vm649, %v538, %v725
    %v734 = vsel %vm650, %v579, %v726
    %v735 = vsel %vm651, %v581, %v727
    %v740 = vrot.slane %v732, 6
    %v741 = vrot.slane %v733, 6
    %v742 = vrot.slane %v734, 6
    %v743 = vrot.slane %v735, 6
    %748 = vst [vmem:[#allocation2 + $0x20] sm:$0x3] %v740
    %749 = vst [vmem:[#allocation2 + $0x28] sm:$0x3] %v741
    %750 = vst [vmem:[#allocation2 + $0x30] sm:$0x3] %v742
    %751 = vst [vmem:[#allocation2 + $0x38] sm:$0x3] %v743
    %v752 = vrot.slane %v540, 6
    %v753 = vrot.slane %v542, 6
    %v754 = vrot.slane %v583, 6
    %v755 = vrot.slane %v585, 6
    %v760 = vsel %vm648, %v536, %v752
    %v761 = vsel %vm649, %v538, %v753
    %v762 = vsel %vm650, %v579, %v754
    %v763 = vsel %vm651, %v581, %v755
    %v768 = vrot.slane %v760, 2
    %v769 = vrot.slane %v761, 2
    %v770 = vrot.slane %v762, 2
    %v771 = vrot.slane %v763, 2
    %776 = vst [vmem:[#allocation2 + $0x20] sm:$0xc] %v768
    %777 = vst [vmem:[#allocation2 + $0x28] sm:$0xc] %v769
    %778 = vst [vmem:[#allocation2 + $0x30] sm:$0xc] %v770
    %779 = vst [vmem:[#allocation2 + $0x38] sm:$0xc] %v771
    %780 = vst [vmem:[#allocation2 + $0x20] sm:$0x30] %v740
    %781 = vst [vmem:[#allocation2 + $0x28] sm:$0x30] %v741
    %782 = vst [vmem:[#allocation2 + $0x30] sm:$0x30] %v742
    %783 = vst [vmem:[#allocation2 + $0x38] sm:$0x30] %v743
    %784 = vst [vmem:[#allocation2 + $0x20] sm:$0xc0] %v768
    %785 = vst [vmem:[#allocation2 + $0x28] sm:$0xc0] %v769
    %786 = vst [vmem:[#allocation2 + $0x30] sm:$0xc0] %v770
    %787 = vst [vmem:[#allocation2 + $0x38] sm:$0xc0] %v771
    %v788 = vld [vmem:[#allocation12] sm:$0xff]
    %v789 = vld [vmem:[#allocation12 + $0x8] sm:$0xff]
    %v790 = vld [vmem:[#allocation12 + $0x10] sm:$0xff]
    %v791 = vld [vmem:[#allocation12 + $0x18] sm:$0xff]
    %v792 = vld [vmem:[#allocation12 + $0x20] sm:$0xff]
    %v793 = vld [vmem:[#allocation12 + $0x28] sm:$0xff]
    %v794 = vld [vmem:[#allocation12 + $0x30] sm:$0xff]
    %v795 = vld [vmem:[#allocation12 + $0x38] sm:$0xff]
    %v796 = vld [vmem:[#allocation12 + $0x40] sm:$0xff]
    %v797 = vld [vmem:[#allocation12 + $0x48] sm:$0xff]
    %v798 = vld [vmem:[#allocation12 + $0x50] sm:$0xff]
    %v799 = vld [vmem:[#allocation12 + $0x58] sm:$0xff]
    %v800 = vld [vmem:[#allocation12 + $0x60] sm:$0xff]
    %v801 = vld [vmem:[#allocation12 + $0x68] sm:$0xff]
    %v802 = vld [vmem:[#allocation12 + $0x70] sm:$0xff]
    %v803 = vld [vmem:[#allocation12 + $0x78] sm:$0xff]
    %v804 = vld [vmem:[#allocation12 + $0x80] sm:$0xff]
    %v805 = vld [vmem:[#allocation12 + $0x88] sm:$0xff]
    %v806 = vld [vmem:[#allocation12 + $0x90] sm:$0xff]
    %v807 = vld [vmem:[#allocation12 + $0x98] sm:$0xff]
    %v808 = vld [vmem:[#allocation12 + $0xa0] sm:$0xff]
    %v809 = vld [vmem:[#allocation12 + $0xa8] sm:$0xff]
    %v810 = vld [vmem:[#allocation12 + $0xb0] sm:$0xff]
    %v811 = vld [vmem:[#allocation12 + $0xb8] sm:$0xff]
    %v812 = vld [vmem:[#allocation12 + $0xc0] sm:$0xff]
    %v813 = vld [vmem:[#allocation12 + $0xc8] sm:$0xff]
    %v814 = vld [vmem:[#allocation12 + $0xd0] sm:$0xff]
    %v815 = vld [vmem:[#allocation12 + $0xd8] sm:$0xff]
    %v816 = vld [vmem:[#allocation12 + $0xe0] sm:$0xff]
    %v817 = vld [vmem:[#allocation12 + $0xe8] sm:$0xff]
    %v818 = vld [vmem:[#allocation12 + $0xf0] sm:$0xff]
    %v819 = vld [vmem:[#allocation12 + $0xf8] sm:$0xff]
    %v820 = vld [vmem:[#allocation2] sm:$0x3]
    %v821 = vld [vmem:[#allocation2 + $0x8] sm:$0x3]
    %v822 = vld [vmem:[#allocation2 + $0x10] sm:$0x3]
    %v823 = vld [vmem:[#allocation2 + $0x18] sm:$0x3]
    %v856 = vunpack.c.l.b16 %v788
    %v857 = vunpack.c.h.b16 %v788
    %v858 = vunpack.c.l.b16 %v789
    %v859 = vunpack.c.h.b16 %v789
    %v860 = vunpack.c.l.b16 %v790
    %v861 = vunpack.c.h.b16 %v790
    %v862 = vunpack.c.l.b16 %v791
    %v863 = vunpack.c.h.b16 %v791
    %v864 = vunpack.c.l.b16 %v792
    %v865 = vunpack.c.h.b16 %v792
    %v866 = vunpack.c.l.b16 %v793
    %v867 = vunpack.c.h.b16 %v793
    %v868 = vunpack.c.l.b16 %v794
    %v869 = vunpack.c.h.b16 %v794
    %v870 = vunpack.c.l.b16 %v795
    %v871 = vunpack.c.h.b16 %v795
    %v872 = vunpack.c.l.b16 %v796
    %v873 = vunpack.c.h.b16 %v796
    %v874 = vunpack.c.l.b16 %v797
    %v875 = vunpack.c.h.b16 %v797
    %v876 = vunpack.c.l.b16 %v798
    %v877 = vunpack.c.h.b16 %v798
    %v878 = vunpack.c.l.b16 %v799
    %v879 = vunpack.c.h.b16 %v799
    %v880 = vunpack.c.l.b16 %v800
    %v881 = vunpack.c.h.b16 %v800
    %v882 = vunpack.c.l.b16 %v801
    %v883 = vunpack.c.h.b16 %v801
    %v884 = vunpack.c.l.b16 %v802
    %v885 = vunpack.c.h.b16 %v802
    %v886 = vunpack.c.l.b16 %v803
    %v887 = vunpack.c.h.b16 %v803
    %v888 = vunpack.c.l.b16 %v804
    %v889 = vunpack.c.h.b16 %v804
    %v890 = vunpack.c.l.b16 %v805
    %v891 = vunpack.c.h.b16 %v805
    %v892 = vunpack.c.l.b16 %v806
    %v893 = vunpack.c.h.b16 %v806
    %v894 = vunpack.c.l.b16 %v807
    %v895 = vunpack.c.h.b16 %v807
    %v896 = vunpack.c.l.b16 %v808
    %v897 = vunpack.c.h.b16 %v808
    %v898 = vunpack.c.l.b16 %v809
    %v899 = vunpack.c.h.b16 %v809
    %v900 = vunpack.c.l.b16 %v810
    %v901 = vunpack.c.h.b16 %v810
    %v902 = vunpack.c.l.b16 %v811
    %v903 = vunpack.c.h.b16 %v811
    %v904 = vunpack.c.l.b16 %v812
    %v905 = vunpack.c.h.b16 %v812
    %v906 = vunpack.c.l.b16 %v813
    %v907 = vunpack.c.h.b16 %v813
    %v908 = vunpack.c.l.b16 %v814
    %v909 = vunpack.c.h.b16 %v814
    %v910 = vunpack.c.l.b16 %v815
    %v911 = vunpack.c.h.b16 %v815
    %v912 = vunpack.c.l.b16 %v816
    %v913 = vunpack.c.h.b16 %v816
    %v914 = vunpack.c.l.b16 %v817
    %v915 = vunpack.c.h.b16 %v817
    %v916 = vunpack.c.l.b16 %v818
    %v917 = vunpack.c.h.b16 %v818
    %v918 = vunpack.c.l.b16 %v819
    %v919 = vunpack.c.h.b16 %v819
    %v920 = vpack.c.b16 %v860, %v856
    %v921 = vpack.c.b16 %v861, %v857
    %v922 = vpack.c.b16 %v862, %v858
    %v923 = vpack.c.b16 %v863, %v859
    %v924 = vpack.c.b16 %v868, %v864
    %v925 = vpack.c.b16 %v869, %v865
    %v926 = vpack.c.b16 %v870, %v866
    %v927 = vpack.c.b16 %v871, %v867
    %v928 = vpack.c.b16 %v876, %v872
    %v929 = vpack.c.b16 %v877, %v873
    %v930 = vpack.c.b16 %v878, %v874
    %v931 = vpack.c.b16 %v879, %v875
    %v932 = vpack.c.b16 %v884, %v880
    %v933 = vpack.c.b16 %v885, %v881
    %v934 = vpack.c.b16 %v886, %v882
    %v935 = vpack.c.b16 %v887, %v883
    %v936 = vpack.c.b16 %v892, %v888
    %v937 = vpack.c.b16 %v893, %v889
    %v938 = vpack.c.b16 %v894, %v890
    %v939 = vpack.c.b16 %v895, %v891
    %v940 = vpack.c.b16 %v900, %v896
    %v941 = vpack.c.b16 %v901, %v897
    %v942 = vpack.c.b16 %v902, %v898
    %v943 = vpack.c.b16 %v903, %v899
    %v944 = vpack.c.b16 %v908, %v904
    %v945 = vpack.c.b16 %v909, %v905
    %v946 = vpack.c.b16 %v910, %v906
    %v947 = vpack.c.b16 %v911, %v907
    %v948 = vpack.c.b16 %v916, %v912
    %v949 = vpack.c.b16 %v917, %v913
    %v950 = vpack.c.b16 %v918, %v914
    %v951 = vpack.c.b16 %v919, %v915
    %984 = vmatprep.subr.bf16.mxu0 %v921
    %985 = vmatpush1.bf16.msra.mxu0 %v920
    %986 = vmatprep.subr.bf16.mxu0 %v925
    %987 = vmatpush1.bf16.msra.mxu0 %v924
    %988 = vmatprep.subr.bf16.mxu0 %v929
    %989 = vmatpush1.bf16.msra.mxu0 %v928
    %990 = vmatprep.subr.bf16.mxu0 %v933
    %991 = vmatpush1.bf16.msra.mxu0 %v932
    %992 = vmatprep.subr.bf16.mxu0 %v937
    %993 = vmatpush1.bf16.msra.mxu0 %v936
    %994 = vmatprep.subr.bf16.mxu0 %v941
    %995 = vmatpush1.bf16.msra.mxu0 %v940
    %996 = vmatprep.subr.bf16.mxu0 %v945
    %997 = vmatpush1.bf16.msra.mxu0 %v944
    %998 = vmatprep.subr.bf16.mxu0 %v949
    %999 = vmatpush1.bf16.msra.mxu0 %v948
    %1000 = vmatprep.subr.bf16.mxu0 0
    %1001 = vmatpush1.bf16.msra.mxu0 0
    %1002 = vmatprep.subr.bf16.mxu0 0
    %1003 = vmatpush1.bf16.msra.mxu0 0
    %1004 = vmatprep.subr.bf16.mxu0 0
    %1005 = vmatpush1.bf16.msra.mxu0 0
    %1006 = vmatprep.subr.bf16.mxu0 0
    %1007 = vmatpush1.bf16.msra.mxu0 0
    %1008 = vmatprep.subr.bf16.mxu0 0
    %1009 = vmatpush1.bf16.msra.mxu0 0
    %1010 = vmatprep.subr.bf16.mxu0 0
    %1011 = vmatpush1.bf16.msra.mxu0 0
    %1012 = vmatprep.subr.bf16.mxu0 0
    %1013 = vmatpush1.bf16.msra.mxu0 0
    %1014 = vmatprep.subr.bf16.mxu0 0
    %1015 = vmatpush1.bf16.msra.mxu0 0
    %1016 = vmatprep.mubr.bf16.mxu0 0
    %1017 = vmatmul.mubr.bf16.gmra.mrb[0].mxu0 0
    %v1018 = vpop.f32.mrb[0].mxu0
    %v1019 = vadd.f32 0.0, %v1018
    %v1020 = vpop.f32.mrb[0].mxu0
    %v1021 = vadd.f32 0.0, %v1020
    %v1022 = vpop.f32.mrb[0].mxu0
    %v1023 = vpop.f32.mrb[0].mxu0
    %1024 = vdwg.mxu0
    %1025 = vmatprep.subr.bf16.mxu0 %v923
    %1026 = vmatpush1.bf16.msra.mxu0 %v922
    %1027 = vmatprep.subr.bf16.mxu0 %v927
    %1028 = vmatpush1.bf16.msra.mxu0 %v926
    %1029 = vmatprep.subr.bf16.mxu0 %v931
    %1030 = vmatpush1.bf16.msra.mxu0 %v930
    %1031 = vmatprep.subr.bf16.mxu0 %v935
    %1032 = vmatpush1.bf16.msra.mxu0 %v934
    %1033 = vmatprep.subr.bf16.mxu0 %v939
    %1034 = vmatpush1.bf16.msra.mxu0 %v938
    %1035 = vmatprep.subr.bf16.mxu0 %v943
    %1036 = vmatpush1.bf16.msra.mxu0 %v942
    %1037 = vmatprep.subr.bf16.mxu0 %v947
    %1038 = vmatpush1.bf16.msra.mxu0 %v946
    %1039 = vmatprep.subr.bf16.mxu0 %v951
    %1040 = vmatpush1.bf16.msra.mxu0 %v950
    %1041 = vmatprep.subr.bf16.mxu0 0
    %1042 = vmatpush1.bf16.msra.mxu0 0
    %1043 = vmatprep.subr.bf16.mxu0 0
    %1044 = vmatpush1.bf16.msra.mxu0 0
    %1045 = vmatprep.subr.bf16.mxu0 0
    %1046 = vmatpush1.bf16.msra.mxu0 0
    %1047 = vmatprep.subr.bf16.mxu0 0
    %1048 = vmatpush1.bf16.msra.mxu0 0
    %1049 = vmatprep.subr.bf16.mxu0 0
    %1050 = vmatpush1.bf16.msra.mxu0 0
    %1051 = vmatprep.subr.bf16.mxu0 0
    %1052 = vmatpush1.bf16.msra.mxu0 0
    %1053 = vmatprep.subr.bf16.mxu0 0
    %1054 = vmatpush1.bf16.msra.mxu0 0
    %1055 = vmatprep.subr.bf16.mxu0 0
    %1056 = vmatpush1.bf16.msra.mxu0 0
    %1057 = vmatprep.mubr.bf16.mxu0 0
    %1058 = vmatmul.mubr.bf16.gmra.mrb[0].mxu0 0
    %v1059 = vpop.f32.mrb[0].mxu0
    %v1060 = vadd.f32 0.0, %v1059
    %v1061 = vpop.f32.mrb[0].mxu0
    %v1062 = vadd.f32 0.0, %v1061
    %v1063 = vpop.f32.mrb[0].mxu0
    %v1064 = vpop.f32.mrb[0].mxu0
    %1065 = vdwg.mxu0
    %v1066 = vadd.f32 %v820, %v1019
    %v1067 = vadd.f32 %v821, %v1021
    %v1068 = vadd.f32 %v822, %v1060
    %v1069 = vadd.f32 %v823, %v1062
    %v1070 = vsub.f32 0.0, %v1066
    %v1071 = vsub.f32 0.0, %v1067
    %v1072 = vsub.f32 0.0, %v1068
    %v1073 = vmul.f32 %v1070, 1.442695
    %v1074 = vpow.pop %v1073
    %v1075 = vmul.f32 %v1071, 1.442695
    %v1076 = vpow.pop %v1075
    %v1077 = vmul.f32 %v1072, 1.442695
    %v1078 = vpow.pop %v1077
    %v1079 = vadd.f32 %v1074, 1.0
    %v1080 = vadd.f32 %v1076, 1.0
    %v1081 = vadd.f32 %v1078, 1.0
    %v1082 = vrcp.pop %v1079
    %v1083 = vmul.f32 1.0, %v1082
    %v1084 = vrcp.pop %v1080
    %v1085 = vmul.f32 1.0, %v1084
    %v1086 = vrcp.pop %v1081
    %v1087 = vmul.f32 1.0, %v1086
    %v1088 = vtanh.pop %v1069
    %v1089 = vmul.f32 %v1085, 0.0
    %v1090 = vmul.f32 %v1083, %v1088
    %v1091 = vadd.f32 %v1089, %v1090
    %v1092 = vtanh.pop %v1091
    %v1093 = vmul.f32 %v1087, %v1092
    %vm1094 = vcmask 517120
    %1095 = vst.msk [vmem:[#allocation3] sm:$0x3] %vm1094, %v1093
    %vm1096 = vcmask 1041920
    %1097 = vst.msk [vmem:[#allocation3 + $0xe] sm:$0x3] %vm1096, %v1093
    %v1098 = vld [vmem:[#allocation2] sm:$0xc]
    %v1099 = vld [vmem:[#allocation2 + $0x8] sm:$0xc]
    %v1100 = vld [vmem:[#allocation2 + $0x10] sm:$0xc]
    %v1101 = vld [vmem:[#allocation2 + $0x18] sm:$0xc]
    %v1102 = vpack.c.bf16 %v1093, %v1093
    %1103 = vmatprep.subr.bf16.mxu0 %v921
    %1104 = vmatpush1.bf16.msra.mxu0 %v920
    %1105 = vmatprep.subr.bf16.mxu0 %v925
    %1106 = vmatpush1.bf16.msra.mxu0 %v924
    %1107 = vmatprep.subr.bf16.mxu0 %v929
    %1108 = vmatpush1.bf16.msra.mxu0 %v928
    %1109 = vmatprep.subr.bf16.mxu0 %v933
    %1110 = vmatpush1.bf16.msra.mxu0 %v932
    %1111 = vmatprep.subr.bf16.mxu0 %v937
    %1112 = vmatpush1.bf16.msra.mxu0 %v936
    %1113 = vmatprep.subr.bf16.mxu0 %v941
    %1114 = vmatpush1.bf16.msra.mxu0 %v940
    %1115 = vmatprep.subr.bf16.mxu0 %v945
    %1116 = vmatpush1.bf16.msra.mxu0 %v944
    %1117 = vmatprep.subr.bf16.mxu0 %v949
    %1118 = vmatpush1.bf16.msra.mxu0 %v948
    %1119 = vmatprep.subr.bf16.mxu0 0
    %1120 = vmatpush1.bf16.msra.mxu0 0
    %1121 = vmatprep.subr.bf16.mxu0 0
    %1122 = vmatpush1.bf16.msra.mxu0 0
    %1123 = vmatprep.subr.bf16.mxu0 0
    %1124 = vmatpush1.bf16.msra.mxu0 0
    %1125 = vmatprep.subr.bf16.mxu0 0
    %1126 = vmatpush1.bf16.msra.mxu0 0
    %1127 = vmatprep.subr.bf16.mxu0 0
    %1128 = vmatpush1.bf16.msra.mxu0 0
    %1129 = vmatprep.subr.bf16.mxu0 0
    %1130 = vmatpush1.bf16.msra.mxu0 0
    %1131 = vmatprep.subr.bf16.mxu0 0
    %1132 = vmatpush1.bf16.msra.mxu0 0
    %1133 = vmatprep.subr.bf16.mxu0 0
    %1134 = vmatpush1.bf16.msra.mxu0 0
    %1135 = vmatprep.mubr.bf16.mxu0 0
    %1136 = vmatmul.mubr.bf16.gmra.mrb[0].mxu0 %v1102
    %v1137 = vpop.f32.mrb[0].mxu0
    %v1138 = vadd.f32 0.0, %v1137
    %v1139 = vpop.f32.mrb[0].mxu0
    %v1140 = vadd.f32 0.0, %v1139
    %v1141 = vpop.f32.mrb[0].mxu0
    %v1142 = vpop.f32.mrb[0].mxu0
    %1143 = vdwg.mxu0
    %1144 = vmatprep.subr.bf16.mxu0 %v923
    %1145 = vmatpush1.bf16.msra.mxu0 %v922
    %1146 = vmatprep.subr.bf16.mxu0 %v927
    %1147 = vmatpush1.bf16.msra.mxu0 %v926
    %1148 = vmatprep.subr.bf16.mxu0 %v931
    %1149 = vmatpush1.bf16.msra.mxu0 %v930
    %1150 = vmatprep.subr.bf16.mxu0 %v935
    %1151 = vmatpush1.bf16.msra.mxu0 %v934
    %1152 = vmatprep.subr.bf16.mxu0 %v939
    %1153 = vmatpush1.bf16.msra.mxu0 %v938
    %1154 = vmatprep.subr.bf16.mxu0 %v943
    %1155 = vmatpush1.bf16.msra.mxu0 %v942
    %1156 = vmatprep.subr.bf16.mxu0 %v947
    %1157 = vmatpush1.bf16.msra.mxu0 %v946
    %1158 = vmatprep.subr.bf16.mxu0 %v951
    %1159 = vmatpush1.bf16.msra.mxu0 %v950
    %1160 = vmatprep.subr.bf16.mxu0 0
    %1161 = vmatpush1.bf16.msra.mxu0 0
    %1162 = vmatprep.subr.bf16.mxu0 0
    %1163 = vmatpush1.bf16.msra.mxu0 0
    %1164 = vmatprep.subr.bf16.mxu0 0
    %1165 = vmatpush1.bf16.msra.mxu0 0
    %1166 = vmatprep.subr.bf16.mxu0 0
    %1167 = vmatpush1.bf16.msra.mxu0 0
    %1168 = vmatprep.subr.bf16.mxu0 0
    %1169 = vmatpush1.bf16.msra.mxu0 0
    %1170 = vmatprep.subr.bf16.mxu0 0
    %1171 = vmatpush1.bf16.msra.mxu0 0
    %1172 = vmatprep.subr.bf16.mxu0 0
    %1173 = vmatpush1.bf16.msra.mxu0 0
    %1174 = vmatprep.subr.bf16.mxu0 0
    %1175 = vmatpush1.bf16.msra.mxu0 0
    %1176 = vmatprep.mubr.bf16.mxu0 0
    %1177 = vmatmul.mubr.bf16.gmra.mrb[0].mxu0 %v1102
    %v1178 = vpop.f32.mrb[0].mxu0
    %v1179 = vadd.f32 0.0, %v1178
    %v1180 = vpop.f32.mrb[0].mxu0
    %v1181 = vadd.f32 0.0, %v1180
    %v1182 = vpop.f32.mrb[0].mxu0
    %v1183 = vpop.f32.mrb[0].mxu0
    %1184 = vdwg.mxu0
    %v1189 = vrot.slane %v1138, 6
    %v1190 = vrot.slane %v1140, 6
    %v1191 = vrot.slane %v1179, 6
    %v1192 = vrot.slane %v1181, 6
    %v1197 = vadd.f32 %v1098, %v1189
    %v1198 = vadd.f32 %v1099, %v1190
    %v1199 = vadd.f32 %v1100, %v1191
    %v1200 = vadd.f32 %v1101, %v1192
    %v1201 = vsub.f32 0.0, %v1197
    %v1202 = vsub.f32 0.0, %v1198
    %v1203 = vsub.f32 0.0, %v1199
    %v1204 = vmul.f32 %v1201, 1.442695
    %v1205 = vpow.pop %v1204
    %v1206 = vmul.f32 %v1202, 1.442695
    %v1207 = vpow.pop %v1206
    %v1208 = vmul.f32 %v1203, 1.442695
    %v1209 = vpow.pop %v1208
    %v1210 = vadd.f32 %v1205, 1.0
    %v1211 = vadd.f32 %v1207, 1.0
    %v1212 = vadd.f32 %v1209, 1.0
    %v1213 = vrcp.pop %v1210
    %v1214 = vmul.f32 1.0, %v1213
    %v1215 = vrcp.pop %v1211
    %v1216 = vmul.f32 1.0, %v1215
    %v1217 = vrcp.pop %v1212
    %v1218 = vmul.f32 1.0, %v1217
    %v1219 = vtanh.pop %v1200
    %v1221 = vrot.slane %v1091, 6
    %v1223 = vmul.f32 %v1216, %v1221
    %v1224 = vmul.f32 %v1214, %v1219
    %v1225 = vadd.f32 %v1223, %v1224
    %v1226 = vtanh.pop %v1225
    %v1227 = vmul.f32 %v1218, %v1226
    %vm1228 = vcmask 519170
    %1229 = vst.msk [vmem:[#allocation3] sm:$0xc] %vm1228, %v1227
    %vm1230 = vcmask 1043970
    %1231 = vst.msk [vmem:[#allocation3 + $0xa] sm:$0xc] %vm1230, %v1227
    %v1232 = vld [vmem:[#allocation2] sm:$0x30]
    %v1233 = vld [vmem:[#allocation2 + $0x8] sm:$0x30]
    %v1234 = vld [vmem:[#allocation2 + $0x10] sm:$0x30]
    %v1235 = vld [vmem:[#allocation2 + $0x18] sm:$0x30]
    %v1236 = vpack.c.bf16 %v1227, %v1227
    %v1238 = vrot.slane %v1236, 1
    %1240 = vmatprep.subr.bf16.mxu0 %v921
    %1241 = vmatpush1.bf16.msra.mxu0 %v920
    %1242 = vmatprep.subr.bf16.mxu0 %v925
    %1243 = vmatpush1.bf16.msra.mxu0 %v924
    %1244 = vmatprep.subr.bf16.mxu0 %v929
    %1245 = vmatpush1.bf16.msra.mxu0 %v928
    %1246 = vmatprep.subr.bf16.mxu0 %v933
    %1247 = vmatpush1.bf16.msra.mxu0 %v932
    %1248 = vmatprep.subr.bf16.mxu0 %v937
    %1249 = vmatpush1.bf16.msra.mxu0 %v936
    %1250 = vmatprep.subr.bf16.mxu0 %v941
    %1251 = vmatpush1.bf16.msra.mxu0 %v940
    %1252 = vmatprep.subr.bf16.mxu0 %v945
    %1253 = vmatpush1.bf16.msra.mxu0 %v944
    %1254 = vmatprep.subr.bf16.mxu0 %v949
    %1255 = vmatpush1.bf16.msra.mxu0 %v948
    %1256 = vmatprep.subr.bf16.mxu0 0
    %1257 = vmatpush1.bf16.msra.mxu0 0
    %1258 = vmatprep.subr.bf16.mxu0 0
    %1259 = vmatpush1.bf16.msra.mxu0 0
    %1260 = vmatprep.subr.bf16.mxu0 0
    %1261 = vmatpush1.bf16.msra.mxu0 0
    %1262 = vmatprep.subr.bf16.mxu0 0
    %1263 = vmatpush1.bf16.msra.mxu0 0
    %1264 = vmatprep.subr.bf16.mxu0 0
    %1265 = vmatpush1.bf16.msra.mxu0 0
    %1266 = vmatprep.subr.bf16.mxu0 0
    %1267 = vmatpush1.bf16.msra.mxu0 0
    %1268 = vmatprep.subr.bf16.mxu0 0
    %1269 = vmatpush1.bf16.msra.mxu0 0
    %1270 = vmatprep.subr.bf16.mxu0 0
    %1271 = vmatpush1.bf16.msra.mxu0 0
    %1272 = vmatprep.mubr.bf16.mxu0 0
    %1273 = vmatmul.mubr.bf16.gmra.mrb[0].mxu0 %v1238
    %v1274 = vpop.f32.mrb[0].mxu0
    %v1275 = vadd.f32 0.0, %v1274
    %v1276 = vpop.f32.mrb[0].mxu0
    %v1277 = vadd.f32 0.0, %v1276
    %v1278 = vpop.f32.mrb[0].mxu0
    %v1279 = vpop.f32.mrb[0].mxu0
    %1280 = vdwg.mxu0
    %1281 = vmatprep.subr.bf16.mxu0 %v923
    %1282 = vmatpush1.bf16.msra.mxu0 %v922
    %1283 = vmatprep.subr.bf16.mxu0 %v927
    %1284 = vmatpush1.bf16.msra.mxu0 %v926
    %1285 = vmatprep.subr.bf16.mxu0 %v931
    %1286 = vmatpush1.bf16.msra.mxu0 %v930
    %1287 = vmatprep.subr.bf16.mxu0 %v935
    %1288 = vmatpush1.bf16.msra.mxu0 %v934
    %1289 = vmatprep.subr.bf16.mxu0 %v939
    %1290 = vmatpush1.bf16.msra.mxu0 %v938
    %1291 = vmatprep.subr.bf16.mxu0 %v943
    %1292 = vmatpush1.bf16.msra.mxu0 %v942
    %1293 = vmatprep.subr.bf16.mxu0 %v947
    %1294 = vmatpush1.bf16.msra.mxu0 %v946
    %1295 = vmatprep.subr.bf16.mxu0 %v951
    %1296 = vmatpush1.bf16.msra.mxu0 %v950
    %1297 = vmatprep.subr.bf16.mxu0 0
    %1298 = vmatpush1.bf16.msra.mxu0 0
    %1299 = vmatprep.subr.bf16.mxu0 0
    %1300 = vmatpush1.bf16.msra.mxu0 0
    %1301 = vmatprep.subr.bf16.mxu0 0
    %1302 = vmatpush1.bf16.msra.mxu0 0
    %1303 = vmatprep.subr.bf16.mxu0 0
    %1304 = vmatpush1.bf16.msra.mxu0 0
    %1305 = vmatprep.subr.bf16.mxu0 0
    %1306 = vmatpush1.bf16.msra.mxu0 0
    %1307 = vmatprep.subr.bf16.mxu0 0
    %1308 = vmatpush1.bf16.msra.mxu0 0
    %1309 = vmatprep.subr.bf16.mxu0 0
    %1310 = vmatpush1.bf16.msra.mxu0 0
    %1311 = vmatprep.subr.bf16.mxu0 0
    %1312 = vmatpush1.bf16.msra.mxu0 0
    %1313 = vmatprep.mubr.bf16.mxu0 0
    %1314 = vmatmul.mubr.bf16.gmra.mrb[0].mxu0 %v1238
    %v1315 = vpop.f32.mrb[0].mxu0
    %v1316 = vadd.f32 0.0, %v1315
    %v1317 = vpop.f32.mrb[0].mxu0
    %v1318 = vadd.f32 0.0, %v1317
    %v1319 = vpop.f32.mrb[0].mxu0
    %v1320 = vpop.f32.mrb[0].mxu0
    %1321 = vdwg.mxu0
    %v1326 = vrot.slane %v1275, 4
    %v1327 = vrot.slane %v1277, 4
    %v1328 = vrot.slane %v1316, 4
    %v1329 = vrot.slane %v1318, 4
    %v1334 = vadd.f32 %v1232, %v1326
    %v1335 = vadd.f32 %v1233, %v1327
    %v1336 = vadd.f32 %v1234, %v1328
    %v1337 = vadd.f32 %v1235, %v1329
    %v1338 = vsub.f32 0.0, %v1334
    %v1339 = vsub.f32 0.0, %v1335
    %v1340 = vsub.f32 0.0, %v1336
    %v1341 = vmul.f32 %v1338, 1.442695
    %v1342 = vpow.pop %v1341
    %v1343 = vmul.f32 %v1339, 1.442695
    %v1344 = vpow.pop %v1343
    %v1345 = vmul.f32 %v1340, 1.442695
    %v1346 = vpow.pop %v1345
    %v1347 = vadd.f32 %v1342, 1.0
    %v1348 = vadd.f32 %v1344, 1.0
    %v1349 = vadd.f32 %v1346, 1.0
    %v1350 = vrcp.pop %v1347
    %v1351 = vmul.f32 1.0, %v1350
    %v1352 = vrcp.pop %v1348
    %v1353 = vmul.f32 1.0, %v1352
    %v1354 = vrcp.pop %v1349
    %v1355 = vmul.f32 1.0, %v1354
    %v1356 = vtanh.pop %v1337
    %v1358 = vrot.slane %v1225, 6
    %v1360 = vmul.f32 %v1353, %v1358
    %v1361 = vmul.f32 %v1351, %v1356
    %v1362 = vadd.f32 %v1360, %v1361
    %v1363 = vtanh.pop %v1362
    %v1364 = vmul.f32 %v1355, %v1363
    %vm1365 = vcmask 521220
    %1366 = vst.msk [vmem:[#allocation3] sm:$0x30] %vm1365, %v1364
    %vm1367 = vcmask 1046020
    %1368 = vst.msk [vmem:[#allocation3 + $0x6] sm:$0x30] %vm1367, %v1364
    %v1369 = vld [vmem:[#allocation2] sm:$0xc0]
    %v1370 = vld [vmem:[#allocation2 + $0x8] sm:$0xc0]
    %v1371 = vld [vmem:[#allocation2 + $0x10] sm:$0xc0]
    %v1372 = vld [vmem:[#allocation2 + $0x18] sm:$0xc0]
    %v1373 = vpack.c.bf16 %v1364, %v1364
    %v1375 = vrot.slane %v1373, 2
    %1377 = vmatprep.subr.bf16.mxu0 %v921
    %1378 = vmatpush1.bf16.msra.mxu0 %v920
    %1379 = vmatprep.subr.bf16.mxu0 %v925
    %1380 = vmatpush1.bf16.msra.mxu0 %v924
    %1381 = vmatprep.subr.bf16.mxu0 %v929
    %1382 = vmatpush1.bf16.msra.mxu0 %v928
    %1383 = vmatprep.subr.bf16.mxu0 %v933
    %1384 = vmatpush1.bf16.msra.mxu0 %v932
    %1385 = vmatprep.subr.bf16.mxu0 %v937
    %1386 = vmatpush1.bf16.msra.mxu0 %v936
    %1387 = vmatprep.subr.bf16.mxu0 %v941
    %1388 = vmatpush1.bf16.msra.mxu0 %v940
    %1389 = vmatprep.subr.bf16.mxu0 %v945
    %1390 = vmatpush1.bf16.msra.mxu0 %v944
    %1391 = vmatprep.subr.bf16.mxu0 %v949
    %1392 = vmatpush1.bf16.msra.mxu0 %v948
    %1393 = vmatprep.subr.bf16.mxu0 0
    %1394 = vmatpush1.bf16.msra.mxu0 0
    %1395 = vmatprep.subr.bf16.mxu0 0
    %1396 = vmatpush1.bf16.msra.mxu0 0
    %1397 = vmatprep.subr.bf16.mxu0 0
    %1398 = vmatpush1.bf16.msra.mxu0 0
    %1399 = vmatprep.subr.bf16.mxu0 0
    %1400 = vmatpush1.bf16.msra.mxu0 0
    %1401 = vmatprep.subr.bf16.mxu0 0
    %1402 = vmatpush1.bf16.msra.mxu0 0
    %1403 = vmatprep.subr.bf16.mxu0 0
    %1404 = vmatpush1.bf16.msra.mxu0 0
    %1405 = vmatprep.subr.bf16.mxu0 0
    %1406 = vmatpush1.bf16.msra.mxu0 0
    %1407 = vmatprep.subr.bf16.mxu0 0
    %1408 = vmatpush1.bf16.msra.mxu0 0
    %1409 = vmatprep.mubr.bf16.mxu0 0
    %1410 = vmatmul.mubr.bf16.gmra.mrb[0].mxu0 %v1375
    %v1411 = vpop.f32.mrb[0].mxu0
    %v1412 = vadd.f32 0.0, %v1411
    %v1413 = vpop.f32.mrb[0].mxu0
    %v1414 = vadd.f32 0.0, %v1413
    %v1415 = vpop.f32.mrb[0].mxu0
    %v1416 = vpop.f32.mrb[0].mxu0
    %1417 = vdwg.mxu0
    %1418 = vmatprep.subr.bf16.mxu0 %v923
    %1419 = vmatpush1.bf16.msra.mxu0 %v922
    %1420 = vmatprep.subr.bf16.mxu0 %v927
    %1421 = vmatpush1.bf16.msra.mxu0 %v926
    %1422 = vmatprep.subr.bf16.mxu0 %v931
    %1423 = vmatpush1.bf16.msra.mxu0 %v930
    %1424 = vmatprep.subr.bf16.mxu0 %v935
    %1425 = vmatpush1.bf16.msra.mxu0 %v934
    %1426 = vmatprep.subr.bf16.mxu0 %v939
    %1427 = vmatpush1.bf16.msra.mxu0 %v938
    %1428 = vmatprep.subr.bf16.mxu0 %v943
    %1429 = vmatpush1.bf16.msra.mxu0 %v942
    %1430 = vmatprep.subr.bf16.mxu0 %v947
    %1431 = vmatpush1.bf16.msra.mxu0 %v946
    %1432 = vmatprep.subr.bf16.mxu0 %v951
    %1433 = vmatpush1.bf16.msra.mxu0 %v950
    %1434 = vmatprep.subr.bf16.mxu0 0
    %1435 = vmatpush1.bf16.msra.mxu0 0
    %1436 = vmatprep.subr.bf16.mxu0 0
    %1437 = vmatpush1.bf16.msra.mxu0 0
    %1438 = vmatprep.subr.bf16.mxu0 0
    %1439 = vmatpush1.bf16.msra.mxu0 0
    %1440 = vmatprep.subr.bf16.mxu0 0
    %1441 = vmatpush1.bf16.msra.mxu0 0
    %1442 = vmatprep.subr.bf16.mxu0 0
    %1443 = vmatpush1.bf16.msra.mxu0 0
    %1444 = vmatprep.subr.bf16.mxu0 0
    %1445 = vmatpush1.bf16.msra.mxu0 0
    %1446 = vmatprep.subr.bf16.mxu0 0
    %1447 = vmatpush1.bf16.msra.mxu0 0
    %1448 = vmatprep.subr.bf16.mxu0 0
    %1449 = vmatpush1.bf16.msra.mxu0 0
    %1450 = vmatprep.mubr.bf16.mxu0 0
    %1451 = vmatmul.mubr.bf16.gmra.mrb[0].mxu0 %v1375
    %v1452 = vpop.f32.mrb[0].mxu0
    %v1453 = vadd.f32 0.0, %v1452
    %v1454 = vpop.f32.mrb[0].mxu0
    %v1455 = vadd.f32 0.0, %v1454
    %v1456 = vpop.f32.mrb[0].mxu0
    %v1457 = vpop.f32.mrb[0].mxu0
    %1458 = vdwg.mxu0
    %v1463 = vrot.slane %v1412, 2
    %v1464 = vrot.slane %v1414, 2
    %v1465 = vrot.slane %v1453, 2
    %v1466 = vrot.slane %v1455, 2
    %v1471 = vadd.f32 %v1369, %v1463
    %v1472 = vadd.f32 %v1370, %v1464
    %v1473 = vadd.f32 %v1371, %v1465
    %v1474 = vadd.f32 %v1372, %v1466
    %v1475 = vsub.f32 0.0, %v1471
    %v1476 = vsub.f32 0.0, %v1472
    %v1477 = vsub.f32 0.0, %v1473
    %v1478 = vmul.f32 %v1475, 1.442695
    %v1479 = vpow.pop %v1478
    %v1480 = vmul.f32 %v1476, 1.442695
    %v1481 = vpow.pop %v1480
    %v1482 = vmul.f32 %v1477, 1.442695
    %v1483 = vpow.pop %v1482
    %v1484 = vadd.f32 %v1479, 1.0
    %v1485 = vadd.f32 %v1481, 1.0
    %v1486 = vadd.f32 %v1483, 1.0
    %v1487 = vrcp.pop %v1484
    %v1488 = vmul.f32 1.0, %v1487
    %v1489 = vrcp.pop %v1485
    %v1490 = vmul.f32 1.0, %v1489
    %v1491 = vrcp.pop %v1486
    %v1492 = vmul.f32 1.0, %v1491
    %v1493 = vtanh.pop %v1474
    %v1495 = vrot.slane %v1362, 6
    %v1497 = vmul.f32 %v1490, %v1495
    %v1498 = vmul.f32 %v1488, %v1493
    %v1499 = vadd.f32 %v1497, %v1498
    %v1500 = vtanh.pop %v1499
    %v1501 = vmul.f32 %v1492, %v1500
    %vm1502 = vcmask 523270
    %1503 = vst.msk [vmem:[#allocation3] sm:$0xc0] %vm1502, %v1501
    %vm1504 = vcmask 1048070
    %1505 = vst.msk [vmem:[#allocation3 + $0x2] sm:$0xc0] %vm1504, %v1501
    %v1506 = vld [vmem:[#allocation2 + $0x20] sm:$0x3]
    %v1507 = vld [vmem:[#allocation2 + $0x28] sm:$0x3]
    %v1508 = vld [vmem:[#allocation2 + $0x30] sm:$0x3]
    %v1509 = vld [vmem:[#allocation2 + $0x38] sm:$0x3]
    %v1510 = vpack.c.bf16 %v1501, %v1501
    %v1512 = vrot.slane %v1510, 3
    %1514 = vmatprep.subr.bf16.mxu0 %v921
    %1515 = vmatpush1.bf16.msra.mxu0 %v920
    %1516 = vmatprep.subr.bf16.mxu0 %v925
    %1517 = vmatpush1.bf16.msra.mxu0 %v924
    %1518 = vmatprep.subr.bf16.mxu0 %v929
    %1519 = vmatpush1.bf16.msra.mxu0 %v928
    %1520 = vmatprep.subr.bf16.mxu0 %v933
    %1521 = vmatpush1.bf16.msra.mxu0 %v932
    %1522 = vmatprep.subr.bf16.mxu0 %v937
    %1523 = vmatpush1.bf16.msra.mxu0 %v936
    %1524 = vmatprep.subr.bf16.mxu0 %v941
    %1525 = vmatpush1.bf16.msra.mxu0 %v940
    %1526 = vmatprep.subr.bf16.mxu0 %v945
    %1527 = vmatpush1.bf16.msra.mxu0 %v944
    %1528 = vmatprep.subr.bf16.mxu0 %v949
    %1529 = vmatpush1.bf16.msra.mxu0 %v948
    %1530 = vmatprep.subr.bf16.mxu0 0
    %1531 = vmatpush1.bf16.msra.mxu0 0
    %1532 = vmatprep.subr.bf16.mxu0 0
    %1533 = vmatpush1.bf16.msra.mxu0 0
    %1534 = vmatprep.subr.bf16.mxu0 0
    %1535 = vmatpush1.bf16.msra.mxu0 0
    %1536 = vmatprep.subr.bf16.mxu0 0
    %1537 = vmatpush1.bf16.msra.mxu0 0
    %1538 = vmatprep.subr.bf16.mxu0 0
    %1539 = vmatpush1.bf16.msra.mxu0 0
    %1540 = vmatprep.subr.bf16.mxu0 0
    %1541 = vmatpush1.bf16.msra.mxu0 0
    %1542 = vmatprep.subr.bf16.mxu0 0
    %1543 = vmatpush1.bf16.msra.mxu0 0
    %1544 = vmatprep.subr.bf16.mxu0 0
    %1545 = vmatpush1.bf16.msra.mxu0 0
    %1546 = vmatprep.mubr.bf16.mxu0 0
    %1547 = vmatmul.mubr.bf16.gmra.mrb[0].mxu0 %v1512
    %v1548 = vpop.f32.mrb[0].mxu0
    %v1549 = vadd.f32 0.0, %v1548
    %v1550 = vpop.f32.mrb[0].mxu0
    %v1551 = vadd.f32 0.0, %v1550
    %v1552 = vpop.f32.mrb[0].mxu0
    %v1553 = vpop.f32.mrb[0].mxu0
    %1554 = vdwg.mxu0
    %1555 = vmatprep.subr.bf16.mxu0 %v923
    %1556 = vmatpush1.bf16.msra.mxu0 %v922
    %1557 = vmatprep.subr.bf16.mxu0 %v927
    %1558 = vmatpush1.bf16.msra.mxu0 %v926
    %1559 = vmatprep.subr.bf16.mxu0 %v931
    %1560 = vmatpush1.bf16.msra.mxu0 %v930
    %1561 = vmatprep.subr.bf16.mxu0 %v935
    %1562 = vmatpush1.bf16.msra.mxu0 %v934
    %1563 = vmatprep.subr.bf16.mxu0 %v939
    %1564 = vmatpush1.bf16.msra.mxu0 %v938
    %1565 = vmatprep.subr.bf16.mxu0 %v943
    %1566 = vmatpush1.bf16.msra.mxu0 %v942
    %1567 = vmatprep.subr.bf16.mxu0 %v947
    %1568 = vmatpush1.bf16.msra.mxu0 %v946
    %1569 = vmatprep.subr.bf16.mxu0 %v951
    %1570 = vmatpush1.bf16.msra.mxu0 %v950
    %1571 = vmatprep.subr.bf16.mxu0 0
    %1572 = vmatpush1.bf16.msra.mxu0 0
    %1573 = vmatprep.subr.bf16.mxu0 0
    %1574 = vmatpush1.bf16.msra.mxu0 0
    %1575 = vmatprep.subr.bf16.mxu0 0
    %1576 = vmatpush1.bf16.msra.mxu0 0
    %1577 = vmatprep.subr.bf16.mxu0 0
    %1578 = vmatpush1.bf16.msra.mxu0 0
    %1579 = vmatprep.subr.bf16.mxu0 0
    %1580 = vmatpush1.bf16.msra.mxu0 0
    %1581 = vmatprep.subr.bf16.mxu0 0
    %1582 = vmatpush1.bf16.msra.mxu0 0
    %1583 = vmatprep.subr.bf16.mxu0 0
    %1584 = vmatpush1.bf16.msra.mxu0 0
    %1585 = vmatprep.subr.bf16.mxu0 0
    %1586 = vmatpush1.bf16.msra.mxu0 0
    %1587 = vmatprep.mubr.bf16.mxu0 0
    %1588 = vmatmul.mubr.bf16.gmra.mrb[0].mxu0 %v1512
    %v1589 = vpop.f32.mrb[0].mxu0
    %v1590 = vadd.f32 0.0, %v1589
    %v1591 = vpop.f32.mrb[0].mxu0
    %v1592 = vadd.f32 0.0, %v1591
    %v1593 = vpop.f32.mrb[0].mxu0
    %v1594 = vpop.f32.mrb[0].mxu0
    %1595 = vdwg.mxu0
    %v1596 = vadd.f32 %v1506, %v1549
    %v1597 = vadd.f32 %v1507, %v1551
    %v1598 = vadd.f32 %v1508, %v1590
    %v1599 = vadd.f32 %v1509, %v1592
    %v1600 = vsub.f32 0.0, %v1596
    %v1601 = vsub.f32 0.0, %v1597
    %v1602 = vsub.f32 0.0, %v1598
    %v1603 = vmul.f32 %v1600, 1.442695
    %v1604 = vpow.pop %v1603
    %v1605 = vmul.f32 %v1601, 1.442695
    %v1606 = vpow.pop %v1605
    %v1607 = vmul.f32 %v1602, 1.442695
    %v1608 = vpow.pop %v1607
    %v1609 = vadd.f32 %v1604, 1.0
    %v1610 = vadd.f32 %v1606, 1.0
    %v1611 = vadd.f32 %v1608, 1.0
    %v1612 = vrcp.pop %v1609
    %v1613 = vmul.f32 1.0, %v1612
    %v1614 = vrcp.pop %v1610
    %v1615 = vmul.f32 1.0, %v1614
    %v1616 = vrcp.pop %v1611
    %v1617 = vmul.f32 1.0, %v1616
    %v1618 = vtanh.pop %v1599
    %v1620 = vrot.slane %v1499, 6
    %v1622 = vmul.f32 %v1615, %v1620
    %v1623 = vmul.f32 %v1613, %v1618
    %v1624 = vadd.f32 %v1622, %v1623
    %v1625 = vtanh.pop %v1624
    %v1626 = vmul.f32 %v1617, %v1625
    %1627 = vst.msk [vmem:[#allocation3 + $0x8] sm:$0x3] %vm1094, %v1626
    %1628 = vst.msk [vmem:[#allocation3 + $0x6] sm:$0x3] %vm1096, %v1626
    %v1629 = vld [vmem:[#allocation2 + $0x20] sm:$0xc]
    %v1630 = vld [vmem:[#allocation2 + $0x28] sm:$0xc]
    %v1631 = vld [vmem:[#allocation2 + $0x30] sm:$0xc]
    %v1632 = vld [vmem:[#allocation2 + $0x38] sm:$0xc]
    %v1633 = vpack.c.bf16 %v1626, %v1626
    %1634 = vmatprep.subr.bf16.mxu0 %v921
    %1635 = vmatpush1.bf16.msra.mxu0 %v920
    %1636 = vmatprep.subr.bf16.mxu0 %v925
    %1637 = vmatpush1.bf16.msra.mxu0 %v924
    %1638 = vmatprep.subr.bf16.mxu0 %v929
    %1639 = vmatpush1.bf16.msra.mxu0 %v928
    %1640 = vmatprep.subr.bf16.mxu0 %v933
    %1641 = vmatpush1.bf16.msra.mxu0 %v932
    %1642 = vmatprep.subr.bf16.mxu0 %v937
    %1643 = vmatpush1.bf16.msra.mxu0 %v936
    %1644 = vmatprep.subr.bf16.mxu0 %v941
    %1645 = vmatpush1.bf16.msra.mxu0 %v940
    %1646 = vmatprep.subr.bf16.mxu0 %v945
    %1647 = vmatpush1.bf16.msra.mxu0 %v944
    %1648 = vmatprep.subr.bf16.mxu0 %v949
    %1649 = vmatpush1.bf16.msra.mxu0 %v948
    %1650 = vmatprep.subr.bf16.mxu0 0
    %1651 = vmatpush1.bf16.msra.mxu0 0
    %1652 = vmatprep.subr.bf16.mxu0 0
    %1653 = vmatpush1.bf16.msra.mxu0 0
    %1654 = vmatprep.subr.bf16.mxu0 0
    %1655 = vmatpush1.bf16.msra.mxu0 0
    %1656 = vmatprep.subr.bf16.mxu0 0
    %1657 = vmatpush1.bf16.msra.mxu0 0
    %1658 = vmatprep.subr.bf16.mxu0 0
    %1659 = vmatpush1.bf16.msra.mxu0 0
    %1660 = vmatprep.subr.bf16.mxu0 0
    %1661 = vmatpush1.bf16.msra.mxu0 0
    %1662 = vmatprep.subr.bf16.mxu0 0
    %1663 = vmatpush1.bf16.msra.mxu0 0
    %1664 = vmatprep.subr.bf16.mxu0 0
    %1665 = vmatpush1.bf16.msra.mxu0 0
    %1666 = vmatprep.mubr.bf16.mxu0 0
    %1667 = vmatmul.mubr.bf16.gmra.mrb[0].mxu0 %v1633
    %v1668 = vpop.f32.mrb[0].mxu0
    %v1669 = vadd.f32 0.0, %v1668
    %v1670 = vpop.f32.mrb[0].mxu0
    %v1671 = vadd.f32 0.0, %v1670
    %v1672 = vpop.f32.mrb[0].mxu0
    %v1673 = vpop.f32.mrb[0].mxu0
    %1674 = vdwg.mxu0
    %1675 = vmatprep.subr.bf16.mxu0 %v923
    %1676 = vmatpush1.bf16.msra.mxu0 %v922
    %1677 = vmatprep.subr.bf16.mxu0 %v927
    %1678 = vmatpush1.bf16.msra.mxu0 %v926
    %1679 = vmatprep.subr.bf16.mxu0 %v931
    %1680 = vmatpush1.bf16.msra.mxu0 %v930
    %1681 = vmatprep.subr.bf16.mxu0 %v935
    %1682 = vmatpush1.bf16.msra.mxu0 %v934
    %1683 = vmatprep.subr.bf16.mxu0 %v939
    %1684 = vmatpush1.bf16.msra.mxu0 %v938
    %1685 = vmatprep.subr.bf16.mxu0 %v943
    %1686 = vmatpush1.bf16.msra.mxu0 %v942
    %1687 = vmatprep.subr.bf16.mxu0 %v947
    %1688 = vmatpush1.bf16.msra.mxu0 %v946
    %1689 = vmatprep.subr.bf16.mxu0 %v951
    %1690 = vmatpush1.bf16.msra.mxu0 %v950
    %1691 = vmatprep.subr.bf16.mxu0 0
    %1692 = vmatpush1.bf16.msra.mxu0 0
    %1693 = vmatprep.subr.bf16.mxu0 0
    %1694 = vmatpush1.bf16.msra.mxu0 0
    %1695 = vmatprep.subr.bf16.mxu0 0
    %1696 = vmatpush1.bf16.msra.mxu0 0
    %1697 = vmatprep.subr.bf16.mxu0 0
    %1698 = vmatpush1.bf16.msra.mxu0 0
    %1699 = vmatprep.subr.bf16.mxu0 0
    %1700 = vmatpush1.bf16.msra.mxu0 0
    %1701 = vmatprep.subr.bf16.mxu0 0
    %1702 = vmatpush1.bf16.msra.mxu0 0
    %1703 = vmatprep.subr.bf16.mxu0 0
    %1704 = vmatpush1.bf16.msra.mxu0 0
    %1705 = vmatprep.subr.bf16.mxu0 0
    %1706 = vmatpush1.bf16.msra.mxu0 0
    %1707 = vmatprep.mubr.bf16.mxu0 0
    %1708 = vmatmul.mubr.bf16.gmra.mrb[0].mxu0 %v1633
    %v1709 = vpop.f32.mrb[0].mxu0
    %v1710 = vadd.f32 0.0, %v1709
    %v1711 = vpop.f32.mrb[0].mxu0
    %v1712 = vadd.f32 0.0, %v1711
    %v1713 = vpop.f32.mrb[0].mxu0
    %v1714 = vpop.f32.mrb[0].mxu0
    %1715 = vdwg.mxu0
    %v1720 = vrot.slane %v1669, 6
    %v1721 = vrot.slane %v1671, 6
    %v1722 = vrot.slane %v1710, 6
    %v1723 = vrot.slane %v1712, 6
    %v1728 = vadd.f32 %v1629, %v1720
    %v1729 = vadd.f32 %v1630, %v1721
    %v1730 = vadd.f32 %v1631, %v1722
    %v1731 = vadd.f32 %v1632, %v1723
    %v1732 = vsub.f32 0.0, %v1728
    %v1733 = vsub.f32 0.0, %v1729
    %v1734 = vsub.f32 0.0, %v1730
    %v1735 = vmul.f32 %v1732, 1.442695
    %v1736 = vpow.pop %v1735
    %v1737 = vmul.f32 %v1733, 1.442695
    %v1738 = vpow.pop %v1737
    %v1739 = vmul.f32 %v1734, 1.442695
    %v1740 = vpow.pop %v1739
    %v1741 = vadd.f32 %v1736, 1.0
    %v1742 = vadd.f32 %v1738, 1.0
    %v1743 = vadd.f32 %v1740, 1.0
    %v1744 = vrcp.pop %v1741
    %v1745 = vmul.f32 1.0, %v1744
    %v1746 = vrcp.pop %v1742
    %v1747 = vmul.f32 1.0, %v1746
    %v1748 = vrcp.pop %v1743
    %v1749 = vmul.f32 1.0, %v1748
    %v1750 = vtanh.pop %v1731
    %v1752 = vrot.slane %v1624, 6
    %v1754 = vmul.f32 %v1747, %v1752
    %v1755 = vmul.f32 %v1745, %v1750
    %v1756 = vadd.f32 %v1754, %v1755
    %v1757 = vtanh.pop %v1756
    %v1758 = vmul.f32 %v1749, %v1757
    %1759 = vst.msk [vmem:[#allocation3 + $0x8] sm:$0xc] %vm1228, %v1758
    %1760 = vst.msk [vmem:[#allocation3 + $0x2] sm:$0xc] %vm1230, %v1758
    %v1761 = vld [vmem:[#allocation2 + $0x20] sm:$0x30]
    %v1762 = vld [vmem:[#allocation2 + $0x28] sm:$0x30]
    %v1763 = vld [vmem:[#allocation2 + $0x30] sm:$0x30]
    %v1764 = vld [vmem:[#allocation2 + $0x38] sm:$0x30]
    %v1765 = vpack.c.bf16 %v1758, %v1758
    %v1767 = vrot.slane %v1765, 1
    %1769 = vmatprep.subr.bf16.mxu0 %v921
    %1770 = vmatpush1.bf16.msra.mxu0 %v920
    %1771 = vmatprep.subr.bf16.mxu0 %v925
    %1772 = vmatpush1.bf16.msra.mxu0 %v924
    %1773 = vmatprep.subr.bf16.mxu0 %v929
    %1774 = vmatpush1.bf16.msra.mxu0 %v928
    %1775 = vmatprep.subr.bf16.mxu0 %v933
    %1776 = vmatpush1.bf16.msra.mxu0 %v932
    %1777 = vmatprep.subr.bf16.mxu0 %v937
    %1778 = vmatpush1.bf16.msra.mxu0 %v936
    %1779 = vmatprep.subr.bf16.mxu0 %v941
    %1780 = vmatpush1.bf16.msra.mxu0 %v940
    %1781 = vmatprep.subr.bf16.mxu0 %v945
    %1782 = vmatpush1.bf16.msra.mxu0 %v944
    %1783 = vmatprep.subr.bf16.mxu0 %v949
    %1784 = vmatpush1.bf16.msra.mxu0 %v948
    %1785 = vmatprep.subr.bf16.mxu0 0
    %1786 = vmatpush1.bf16.msra.mxu0 0
    %1787 = vmatprep.subr.bf16.mxu0 0
    %1788 = vmatpush1.bf16.msra.mxu0 0
    %1789 = vmatprep.subr.bf16.mxu0 0
    %1790 = vmatpush1.bf16.msra.mxu0 0
    %1791 = vmatprep.subr.bf16.mxu0 0
    %1792 = vmatpush1.bf16.msra.mxu0 0
    %1793 = vmatprep.subr.bf16.mxu0 0
    %1794 = vmatpush1.bf16.msra.mxu0 0
    %1795 = vmatprep.subr.bf16.mxu0 0
    %1796 = vmatpush1.bf16.msra.mxu0 0
    %1797 = vmatprep.subr.bf16.mxu0 0
    %1798 = vmatpush1.bf16.msra.mxu0 0
    %1799 = vmatprep.subr.bf16.mxu0 0
    %1800 = vmatpush1.bf16.msra.mxu0 0
    %1801 = vmatprep.mubr.bf16.mxu0 0
    %1802 = vmatmul.mubr.bf16.gmra.mrb[0].mxu0 %v1767
    %v1803 = vpop.f32.mrb[0].mxu0
    %v1804 = vadd.f32 0.0, %v1803
    %v1805 = vpop.f32.mrb[0].mxu0
    %v1806 = vadd.f32 0.0, %v1805
    %v1807 = vpop.f32.mrb[0].mxu0
    %v1808 = vpop.f32.mrb[0].mxu0
    %1809 = vdwg.mxu0
    %1810 = vmatprep.subr.bf16.mxu0 %v923
    %1811 = vmatpush1.bf16.msra.mxu0 %v922
    %1812 = vmatprep.subr.bf16.mxu0 %v927
    %1813 = vmatpush1.bf16.msra.mxu0 %v926
    %1814 = vmatprep.subr.bf16.mxu0 %v931
    %1815 = vmatpush1.bf16.msra.mxu0 %v930
    %1816 = vmatprep.subr.bf16.mxu0 %v935
    %1817 = vmatpush1.bf16.msra.mxu0 %v934
    %1818 = vmatprep.subr.bf16.mxu0 %v939
    %1819 = vmatpush1.bf16.msra.mxu0 %v938
    %1820 = vmatprep.subr.bf16.mxu0 %v943
    %1821 = vmatpush1.bf16.msra.mxu0 %v942
    %1822 = vmatprep.subr.bf16.mxu0 %v947
    %1823 = vmatpush1.bf16.msra.mxu0 %v946
    %1824 = vmatprep.subr.bf16.mxu0 %v951
    %1825 = vmatpush1.bf16.msra.mxu0 %v950
    %1826 = vmatprep.subr.bf16.mxu0 0
    %1827 = vmatpush1.bf16.msra.mxu0 0
    %1828 = vmatprep.subr.bf16.mxu0 0
    %1829 = vmatpush1.bf16.msra.mxu0 0
    %1830 = vmatprep.subr.bf16.mxu0 0
    %1831 = vmatpush1.bf16.msra.mxu0 0
    %1832 = vmatprep.subr.bf16.mxu0 0
    %1833 = vmatpush1.bf16.msra.mxu0 0
    %1834 = vmatprep.subr.bf16.mxu0 0
    %1835 = vmatpush1.bf16.msra.mxu0 0
    %1836 = vmatprep.subr.bf16.mxu0 0
    %1837 = vmatpush1.bf16.msra.mxu0 0
    %1838 = vmatprep.subr.bf16.mxu0 0
    %1839 = vmatpush1.bf16.msra.mxu0 0
    %1840 = vmatprep.subr.bf16.mxu0 0
    %1841 = vmatpush1.bf16.msra.mxu0 0
    %1842 = vmatprep.mubr.bf16.mxu0 0
    %1843 = vmatmul.mubr.bf16.gmra.mrb[0].mxu0 %v1767
    %v1844 = vpop.f32.mrb[0].mxu0
    %v1845 = vadd.f32 0.0, %v1844
    %v1846 = vpop.f32.mrb[0].mxu0
    %v1847 = vadd.f32 0.0, %v1846
    %v1848 = vpop.f32.mrb[0].mxu0
    %v1849 = vpop.f32.mrb[0].mxu0
    %1850 = vdwg.mxu0
    %v1855 = vrot.slane %v1804, 4
    %v1856 = vrot.slane %v1806, 4
    %v1857 = vrot.slane %v1845, 4
    %v1858 = vrot.slane %v1847, 4
    %v1863 = vadd.f32 %v1761, %v1855
    %v1864 = vadd.f32 %v1762, %v1856
    %v1865 = vadd.f32 %v1763, %v1857
    %v1866 = vadd.f32 %v1764, %v1858
    %v1867 = vsub.f32 0.0, %v1863
    %v1868 = vsub.f32 0.0, %v1864
    %v1869 = vsub.f32 0.0, %v1865
    %v1870 = vmul.f32 %v1867, 1.442695
    %v1871 = vpow.pop %v1870
    %v1872 = vmul.f32 %v1868, 1.442695
    %v1873 = vpow.pop %v1872
    %v1874 = vmul.f32 %v1869, 1.442695
    %v1875 = vpow.pop %v1874
    %v1876 = vadd.f32 %v1871, 1.0
    %v1877 = vadd.f32 %v1873, 1.0
    %v1878 = vadd.f32 %v1875, 1.0
    %v1879 = vrcp.pop %v1876
    %v1880 = vmul.f32 1.0, %v1879
    %v1881 = vrcp.pop %v1877
    %v1882 = vmul.f32 1.0, %v1881
    %v1883 = vrcp.pop %v1878
    %v1884 = vmul.f32 1.0, %v1883
    %v1885 = vtanh.pop %v1866
    %v1887 = vrot.slane %v1756, 6
    %v1889 = vmul.f32 %v1882, %v1887
    %v1890 = vmul.f32 %v1880, %v1885
    %v1891 = vadd.f32 %v1889, %v1890
    %v1892 = vtanh.pop %v1891
    %v1893 = vmul.f32 %v1884, %v1892
    %1894 = vst.msk [vmem:[#allocation3 + $0x8] sm:$0x30] %vm1365, %v1893
    %1895 = vst.msk [vmem:[#allocation3 - $0x2] sm:$0x30] %vm1367, %v1893
    %v1896 = vld [vmem:[#allocation2 + $0x20] sm:$0xc0]
    %v1897 = vld [vmem:[#allocation2 + $0x28] sm:$0xc0]
    %v1898 = vld [vmem:[#allocation2 + $0x30] sm:$0xc0]
    %v1899 = vld [vmem:[#allocation2 + $0x38] sm:$0xc0]
    %v1900 = vpack.c.bf16 %v1893, %v1893
    %v1902 = vrot.slane %v1900, 2
    %1904 = vmatprep.subr.bf16.mxu0 %v921
    %1905 = vmatpush1.bf16.msra.mxu0 %v920
    %1906 = vmatprep.subr.bf16.mxu0 %v925
    %1907 = vmatpush1.bf16.msra.mxu0 %v924
    %1908 = vmatprep.subr.bf16.mxu0 %v929
    %1909 = vmatpush1.bf16.msra.mxu0 %v928
    %1910 = vmatprep.subr.bf16.mxu0 %v933
    %1911 = vmatpush1.bf16.msra.mxu0 %v932
    %1912 = vmatprep.subr.bf16.mxu0 %v937
    %1913 = vmatpush1.bf16.msra.mxu0 %v936
    %1914 = vmatprep.subr.bf16.mxu0 %v941
    %1915 = vmatpush1.bf16.msra.mxu0 %v940
    %1916 = vmatprep.subr.bf16.mxu0 %v945
    %1917 = vmatpush1.bf16.msra.mxu0 %v944
    %1918 = vmatprep.subr.bf16.mxu0 %v949
    %1919 = vmatpush1.bf16.msra.mxu0 %v948
    %1920 = vmatprep.subr.bf16.mxu0 0
    %1921 = vmatpush1.bf16.msra.mxu0 0
    %1922 = vmatprep.subr.bf16.mxu0 0
    %1923 = vmatpush1.bf16.msra.mxu0 0
    %1924 = vmatprep.subr.bf16.mxu0 0
    %1925 = vmatpush1.bf16.msra.mxu0 0
    %1926 = vmatprep.subr.bf16.mxu0 0
    %1927 = vmatpush1.bf16.msra.mxu0 0
    %1928 = vmatprep.subr.bf16.mxu0 0
    %1929 = vmatpush1.bf16.msra.mxu0 0
    %1930 = vmatprep.subr.bf16.mxu0 0
    %1931 = vmatpush1.bf16.msra.mxu0 0
    %1932 = vmatprep.subr.bf16.mxu0 0
    %1933 = vmatpush1.bf16.msra.mxu0 0
    %1934 = vmatprep.subr.bf16.mxu0 0
    %1935 = vmatpush1.bf16.msra.mxu0 0
    %1936 = vmatprep.mubr.bf16.mxu0 0
    %1937 = vmatmul.mubr.bf16.gmra.mrb[0].mxu0 %v1902
    %v1938 = vpop.f32.mrb[0].mxu0
    %v1939 = vadd.f32 0.0, %v1938
    %v1940 = vpop.f32.mrb[0].mxu0
    %v1941 = vadd.f32 0.0, %v1940
    %v1942 = vpop.f32.mrb[0].mxu0
    %v1943 = vpop.f32.mrb[0].mxu0
    %1944 = vdwg.mxu0
    %1945 = vmatprep.subr.bf16.mxu0 %v923
    %1946 = vmatpush1.bf16.msra.mxu0 %v922
    %1947 = vmatprep.subr.bf16.mxu0 %v927
    %1948 = vmatpush1.bf16.msra.mxu0 %v926
    %1949 = vmatprep.subr.bf16.mxu0 %v931
    %1950 = vmatpush1.bf16.msra.mxu0 %v930
    %1951 = vmatprep.subr.bf16.mxu0 %v935
    %1952 = vmatpush1.bf16.msra.mxu0 %v934
    %1953 = vmatprep.subr.bf16.mxu0 %v939
    %1954 = vmatpush1.bf16.msra.mxu0 %v938
    %1955 = vmatprep.subr.bf16.mxu0 %v943
    %1956 = vmatpush1.bf16.msra.mxu0 %v942
    %1957 = vmatprep.subr.bf16.mxu0 %v947
    %1958 = vmatpush1.bf16.msra.mxu0 %v946
    %1959 = vmatprep.subr.bf16.mxu0 %v951
    %1960 = vmatpush1.bf16.msra.mxu0 %v950
    %1961 = vmatprep.subr.bf16.mxu0 0
    %1962 = vmatpush1.bf16.msra.mxu0 0
    %1963 = vmatprep.subr.bf16.mxu0 0
    %1964 = vmatpush1.bf16.msra.mxu0 0
    %1965 = vmatprep.subr.bf16.mxu0 0
    %1966 = vmatpush1.bf16.msra.mxu0 0
    %1967 = vmatprep.subr.bf16.mxu0 0
    %1968 = vmatpush1.bf16.msra.mxu0 0
    %1969 = vmatprep.subr.bf16.mxu0 0
    %1970 = vmatpush1.bf16.msra.mxu0 0
    %1971 = vmatprep.subr.bf16.mxu0 0
    %1972 = vmatpush1.bf16.msra.mxu0 0
    %1973 = vmatprep.subr.bf16.mxu0 0
    %1974 = vmatpush1.bf16.msra.mxu0 0
    %1975 = vmatprep.subr.bf16.mxu0 0
    %1976 = vmatpush1.bf16.msra.mxu0 0
    %1977 = vmatprep.mubr.bf16.mxu0 0
    %1978 = vmatmul.mubr.bf16.gmra.mrb[0].mxu0 %v1902
    %v1979 = vpop.f32.mrb[0].mxu0
    %v1980 = vadd.f32 0.0, %v1979
    %v1981 = vpop.f32.mrb[0].mxu0
    %v1982 = vadd.f32 0.0, %v1981
    %v1983 = vpop.f32.mrb[0].mxu0
    %v1984 = vpop.f32.mrb[0].mxu0
    %1985 = vdwg.mxu0
    %v1990 = vrot.slane %v1939, 2
    %v1991 = vrot.slane %v1941, 2
    %v1992 = vrot.slane %v1980, 2
    %v1993 = vrot.slane %v1982, 2
    %v1998 = vadd.f32 %v1896, %v1990
    %v1999 = vadd.f32 %v1897, %v1991
    %v2000 = vadd.f32 %v1898, %v1992
    %v2001 = vadd.f32 %v1899, %v1993
    %v2002 = vsub.f32 0.0, %v1998
    %v2003 = vsub.f32 0.0, %v1999
    %v2004 = vsub.f32 0.0, %v2000
    %v2005 = vmul.f32 %v2002, 1.442695
    %v2006 = vpow.pop %v2005
    %v2007 = vmul.f32 %v2003, 1.442695
    %v2008 = vpow.pop %v2007
    %v2009 = vmul.f32 %v2004, 1.442695
    %v2010 = vpow.pop %v2009
    %v2011 = vadd.f32 %v2006, 1.0
    %v2012 = vadd.f32 %v2008, 1.0
    %v2013 = vadd.f32 %v2010, 1.0
    %v2014 = vrcp.pop %v2011
    %v2015 = vmul.f32 1.0, %v2014
    %v2016 = vrcp.pop %v2012
    %v2017 = vmul.f32 1.0, %v2016
    %v2018 = vrcp.pop %v2013
    %v2019 = vmul.f32 1.0, %v2018
    %v2020 = vtanh.pop %v2001
    %v2022 = vrot.slane %v1891, 6
    %v2024 = vmul.f32 %v2017, %v2022
    %v2025 = vmul.f32 %v2015, %v2020
    %v2026 = vadd.f32 %v2024, %v2025
    %v2027 = vtanh.pop %v2026
    %v2028 = vmul.f32 %v2019, %v2027
    %2029 = vst.msk [vmem:[#allocation3 + $0x8] sm:$0xc0] %vm1502, %v2028
    %2030 = vst.msk [vmem:[#allocation3 - $0x6] sm:$0xc0] %vm1504, %v2028
    %v2031 = vld [vmem:[#allocation3] sm:$0xff]
    %v2032 = vld [vmem:[#allocation3 + $0x8] sm:$0xff]
    %v2033 = vpack.c.bf16 %v2032, %v2031
    %v2034 = vld [vmem:[%s10] sm:$0xf]
    %v2035 = vld [vmem:[%s10 + $0x4] sm:$0xf]
    %v2036 = vld [vmem:[%s10 + $0x8] sm:$0xf]
    %v2037 = vld [vmem:[%s10 + $0xc] sm:$0xf]
    %v2038 = vld [vmem:[%s10 + $0x10] sm:$0xf]
    %v2039 = vld [vmem:[%s10 + $0x14] sm:$0xf]
    %v2040 = vld [vmem:[%s10 + $0x18] sm:$0xf]
    %v2041 = vld [vmem:[%s10 + $0x1c] sm:$0xf]
    %v2042 = vld [vmem:[%s10 + $0x20] sm:$0xf]
    %v2043 = vld [vmem:[%s10 + $0x24] sm:$0xf]
    %v2044 = vld [vmem:[%s10 + $0x28] sm:$0xf]
    %v2045 = vld [vmem:[%s10 + $0x2c] sm:$0xf]
    %v2046 = vld [vmem:[%s10 + $0x30] sm:$0xf]
    %v2047 = vld [vmem:[%s10 + $0x34] sm:$0xf]
    %v2048 = vld [vmem:[%s10 + $0x38] sm:$0xf]
    %v2049 = vld [vmem:[%s10 + $0x3c] sm:$0xf]
    %v2050 = vld [vmem:[#allocation14] sm:$0x1]
    %v2052 = vlaneseq
    %v2053 = vshrl.u32 %v2052, 7
    %v2054 = vsub.s32 0, %v2053
    %v2055 = vrot.slane %v2050, %v2054
    %v2073 = vunpack.c.l.b16 %v2034
    %v2074 = vunpack.c.l.b16 %v2035
    %v2075 = vunpack.c.l.b16 %v2036
    %v2076 = vunpack.c.l.b16 %v2037
    %v2077 = vunpack.c.l.b16 %v2038
    %v2078 = vunpack.c.l.b16 %v2039
    %v2079 = vunpack.c.l.b16 %v2040
    %v2080 = vunpack.c.l.b16 %v2041
    %v2081 = vunpack.c.l.b16 %v2042
    %v2082 = vunpack.c.l.b16 %v2043
    %v2083 = vunpack.c.l.b16 %v2044
    %v2084 = vunpack.c.l.b16 %v2045
    %v2085 = vunpack.c.l.b16 %v2046
    %v2086 = vunpack.c.l.b16 %v2047
    %v2087 = vunpack.c.l.b16 %v2048
    %v2088 = vunpack.c.l.b16 %v2049
    %v2089 = vpack.c.b16 %v2074, %v2073
    %v2090 = vpack.c.b16 %v2076, %v2075
    %v2091 = vpack.c.b16 %v2078, %v2077
    %v2092 = vpack.c.b16 %v2080, %v2079
    %v2093 = vpack.c.b16 %v2082, %v2081
    %v2094 = vpack.c.b16 %v2084, %v2083
    %v2095 = vpack.c.b16 %v2086, %v2085
    %v2096 = vpack.c.b16 %v2088, %v2087
    %2105 = vmatprep.subr.bf16.mxu0 0
    %2106 = vmatpush1.bf16.msra.mxu0 %v2089
    %2107 = vmatprep.subr.bf16.mxu0 0
    %2108 = vmatpush1.bf16.msra.mxu0 %v2090
    %2109 = vmatprep.subr.bf16.mxu0 0
    %2110 = vmatpush1.bf16.msra.mxu0 %v2091
    %2111 = vmatprep.subr.bf16.mxu0 0
    %2112 = vmatpush1.bf16.msra.mxu0 %v2092
    %2113 = vmatprep.subr.bf16.mxu0 0
    %2114 = vmatpush1.bf16.msra.mxu0 %v2093
    %2115 = vmatprep.subr.bf16.mxu0 0
    %2116 = vmatpush1.bf16.msra.mxu0 %v2094
    %2117 = vmatprep.subr.bf16.mxu0 0
    %2118 = vmatpush1.bf16.msra.mxu0 %v2095
    %2119 = vmatprep.subr.bf16.mxu0 0
    %2120 = vmatpush1.bf16.msra.mxu0 %v2096
    %2121 = vmatprep.subr.bf16.mxu0 0
    %2122 = vmatpush1.bf16.msra.mxu0 0
    %2123 = vmatprep.subr.bf16.mxu0 0
    %2124 = vmatpush1.bf16.msra.mxu0 0
    %2125 = vmatprep.subr.bf16.mxu0 0
    %2126 = vmatpush1.bf16.msra.mxu0 0
    %2127 = vmatprep.subr.bf16.mxu0 0
    %2128 = vmatpush1.bf16.msra.mxu0 0
    %2129 = vmatprep.subr.bf16.mxu0 0
    %2130 = vmatpush1.bf16.msra.mxu0 0
    %2131 = vmatprep.subr.bf16.mxu0 0
    %2132 = vmatpush1.bf16.msra.mxu0 0
    %2133 = vmatprep.subr.bf16.mxu0 0
    %2134 = vmatpush1.bf16.msra.mxu0 0
    %2135 = vmatprep.subr.bf16.mxu0 0
    %2136 = vmatpush1.bf16.msra.mxu0 0
    %2137 = vmatprep.mubr.bf16.mxu0 0
    %2138 = vmatmul.mubr.bf16.gmra.mrb[0].mxu0 %v2033
    %v2139 = vpop.f32.mrb[0].mxu0
    %v2140 = vadd.f32 %v2055, %v2139
    %v2141 = vpop.f32.mrb[0].mxu0
    %v2142 = vpop.f32.mrb[0].mxu0
    %v2143 = vadd.f32 %v2055, %v2142
    %v2144 = vpop.f32.mrb[0].mxu0
    %2145 = vdwg.mxu0
    %v2146 = vmax.f32 %v2140, 0.0
    %v2147 = vmax.f32 %v2143, 0.0
    %vm2148 = vcmask 146432
    %2149 = vst.msk [vmem:[%s12] sm:$0xff] %vm2148, %v2146
    %2150 = vst.msk [vmem:[%s12 + $0x8] sm:$0xff] %vm2148, %v2147
    // Predicated region
    $region78: #{multidnn_rnn_forward.1} parent=1 // pred_check
      _
    $region79: #{multidnn_rnn_forward.1} parent=1 // pred_check_branch
      %2152 = sbr.rel (0) target = $region81
    $region80: #{multidnn_rnn_forward.1} parent=1 // pred_region
      _
    $region81: #{multidnn_rnn_forward.1} parent=1 // pred_fallthru
      _
    // Predicated region
    $region82: #{multidnn_rnn_forward.1} parent=1 // pred_check
      _
    $region83: #{multidnn_rnn_forward.1} parent=1 // pred_check_branch
      %2154 = sbr.rel (0) target = $region85
    $region84: #{multidnn_rnn_forward.1} parent=1 // pred_region
      _
    $region85: #{multidnn_rnn_forward.1} parent=1 // pred_fallthru
      _
    %2155 = vsyncpa [#allocation5], 1
    %2156 = vsyncpa [#allocation7], 1
    %2157 = vsyncpa [#allocation10], 1
    %2158 = vsyncpa [#allocation13], 1

</llo_original>
